<compile_context>
chip_gen: v7x
topology: tpu7x:2x2x1
jax: 0.10.0
libtpu: 0.0.40
codegen_flags: <defaults>
</compile_context>

<pallas_src>
import functools

import jax
import jax.numpy as jnp
from jax.experimental import pallas as pl
from jax.experimental.pallas import tpu as pltpu


def _round_up(n, m):
    return ((n + m - 1) // m) * m


def layer_dual_kernel(x_ref, tt_ref, xexp_ref, kexp_ref, weff_ref, wdrv_ref,
                      bias_ref, o_ref, *, inv_two_sigma2, pd):
    """One TILE_B-row block of the batch; all weights/targets VMEM-resident."""
    x = x_ref[...]                                                          # (TB, D_in) f32

    # One fused matmul: [x_rep | xt] = x @ [xexp | t^T]
    #   x_rep[b, p*D+d] = x[b,d]   (broadcast-by-0/1-matmul, no in-kernel relayout)
    #   xt[b, p]        = <x_b, t_p>
    r = jnp.dot(x, xexp_ref[...], preferred_element_type=jnp.float32)       # (TB, P*D + P)
    x_rep = r[:, :pd]                                                        # (TB, P*D)
    xt = r[:, pd:]                                                           # (TB, P)

    # RBF kernel matrix via norm expansion, clamped >= 0 (cancellation guard).
    xx = jnp.sum(x * x, axis=-1, keepdims=True)                              # (TB, 1)
    sq = jnp.maximum(xx + tt_ref[...] - 2.0 * xt, 0.0)                       # (TB, P)
    kmat = jnp.exp(-inv_two_sigma2 * sq)                                     # (TB, P)  (EUP)

    # k_rep[b, p*D+d] = K[b,p] via 0/1 matmul; target term already folded into W_eff.
    k_rep = jnp.dot(kmat, kexp_ref[...], preferred_element_type=jnp.float32)  # (TB, P*D)
    g = k_rep * x_rep                                                          # (TB, P*D)

    # Fused, pre-scaled output: K @ W_eff + G @ W_drv_flat  (1/sigma^2 and 1/p_reg baked in).
    acc = jnp.dot(kmat, weff_ref[...], preferred_element_type=jnp.float32)     # (TB, D_out)
    acc = acc + jnp.dot(g, wdrv_ref[...], preferred_element_type=jnp.float32)  # (TB, D_out)
    o_ref[...] = acc + bias_ref[...]


def init_layer_dual_params(targets, w_err, w_drv, bias, *, sigma=1.0, p_reg=1.0):
    """Module-init-time prep: all parameter-shaped constants, hoisted out of the call path."""
    f32 = jnp.float32
    targets = targets.astype(f32)
    w_err = w_err.astype(f32)
    w_drv = w_drv.astype(f32)
    bias = bias.astype(f32)
    P, d_in = targets.shape
    Pw, d_out = w_err.shape
    assert P == Pw and w_drv.shape == (P, d_in, d_out)

    inv_sig2 = 1.0 / (sigma * sigma)
    inv_preg = 1.0 / p_reg

    # Fold  sum_p K[b,p] * (t_p @ W_drv[p]) / sigma^2  into the K contraction, and fold
    # the 1/sigma^2, 1/p_reg scalars into the weight slabs.
    m = jnp.einsum('pd,pdo->po', targets, w_drv)                       # (P, D_out)
    w_eff = (w_err - m * inv_sig2) * inv_preg                          # (P, D_out)
    wdrv_flat = w_drv.reshape(P * d_in, d_out) * (inv_sig2 * inv_preg)  # (P*D_in, D_out)

    tt = jnp.sum(targets * targets, axis=-1)[None, :]                  # (1, P)
    # 0/1 expansion matrices; t^T is appended so one matmul produces [x_rep | xt].
    xexp = jnp.tile(jnp.eye(d_in, dtype=f32), (1, P))                  # (D_in, P*D_in)
    xexp_aug = jnp.concatenate([xexp, targets.T], axis=1)              # (D_in, P*D_in + P)
    kexp = jnp.repeat(jnp.eye(P, dtype=f32), d_in, axis=1)             # (P,    P*D_in)
    bias2 = bias.reshape(1, d_out)                                     # (1, D_out)

    return dict(tt=tt, xexp_aug=xexp_aug, kexp=kexp, w_eff=w_eff,
                wdrv_flat=wdrv_flat, bias=bias2,
                sigma=float(sigma), dims=(int(P), int(d_in), int(d_out)))


def layer_dual_forward(x, params, *, block_b=None):
    """Pallas wrapper: batch grid, weights resident, x/out streamed per tile."""
    f32 = jnp.float32
    P, d_in, d_out = params['dims']
    pd = P * d_in
    B, d_in_x = x.shape
    assert d_in_x == d_in
    assert d_in == d_out, "torch forward (x_new = zeros_like(x); x_new += ...) requires dim_in == dim_out"
    x = x.astype(f32)

    # ---- batch tiling (sublane-aligned) -------------------------------------------------
    b8 = _round_up(B, 8)
    if block_b is None:
        # Large tiles amortize per-grid-step overhead on single-TC chips (v5e/v6e);
        # keep >= 2 steps when the batch is big enough so v7x's two TCs both get work.
        tb = b8 if b8 < 256 else min(512, _round_up(pl.cdiv(b8, 2), 8))
    else:
        tb = _round_up(max(8, min(int(block_b), b8)), 8)
    b_pad = _round_up(B, tb)
    if b_pad != B:
        x = jnp.pad(x, ((0, b_pad - B), (0, 0)))
    grid = (b_pad // tb,)

    kern = functools.partial(layer_dual_kernel,
                             inv_two_sigma2=0.5 / (params['sigma'] ** 2), pd=pd)

    grid_spec = pltpu.PrefetchScalarGridSpec(
        num_scalar_prefetch=0,
        grid=grid,
        in_specs=[
            pl.BlockSpec((tb, d_in), lambda i: (i, 0)),           # x          (streamed)
            pl.BlockSpec((1, P), lambda i: (0, 0)),               # ||t||^2    (resident)
            pl.BlockSpec((d_in, pd + P), lambda i: (0, 0)),       # [xexp | t^T]
            pl.BlockSpec((P, pd), lambda i: (0, 0)),              # K expansion matrix
            pl.BlockSpec((P, d_out), lambda i: (0, 0)),           # W_eff (target term folded)
            pl.BlockSpec((pd, d_out), lambda i: (0, 0)),          # W_drv flat, pre-scaled
            pl.BlockSpec((1, d_out), lambda i: (0, 0)),           # bias
        ],
        out_specs=pl.BlockSpec((tb, d_out), lambda i: (i, 0)),
    )

    out = pl.pallas_call(
        kern,
        out_shape=jax.ShapeDtypeStruct((b_pad, d_out), f32),
        grid_spec=grid_spec,
        compiler_params=pltpu.CompilerParams(
            dimension_semantics=("parallel",),     # batch tiles split across TCs on v7x
        ),
    )(x, params['tt'], params['xexp_aug'], params['kexp'],
      params['w_eff'], params['wdrv_flat'], params['bias'])

    return out[:B]


def layer_dual_reference(x, targets, w_err, w_drv, bias, *, sigma=1.0, p_reg=1.0):
    """Pure-JAX reference mirroring the PyTorch forward (correctness check)."""
    diff = x[:, None, :] - targets[None, :, :]                         # (B, P, D)
    kmat = jnp.exp(-0.5 * jnp.sum(diff * diff, axis=-1) / sigma ** 2)  # (B, P)
    out = kmat @ w_err                                                 # (B, D_out)
    grad = kmat[:, :, None] * diff / sigma ** 2                        # (B, P, D_in)
    out = out + jnp.einsum('bpi,pij->bj', grad, w_drv)
    return out / p_reg + bias


if __name__ == "__main__":
    # Small, module-consistent shapes: batch B, num_data (targets) P, dim_in == dim_out == D.
    B, P, D = 256, 8, 32
    sigma = 1.0      # kernel_param
    p_reg = 2.0      # regularization hyper-parameter

    key = jax.random.PRNGKey(0)
    k_x, k_t, k_we, k_wd = jax.random.split(key, 4)

    x = jax.random.normal(k_x, (B, D), dtype=jnp.float32)
    targets = jax.random.normal(k_t, (P, D), dtype=jnp.float32)

    # Deterministic xavier_uniform_-style parameter init (synthetic, no checkpoint).
    bnd_err = (6.0 / (P + D)) ** 0.5
    w_err = jax.random.uniform(k_we, (P, D), jnp.float32, -bnd_err, bnd_err)
    bnd_drv = (6.0 / (D + D)) ** 0.5
    w_drv = jax.random.uniform(k_wd, (P, D, D), jnp.float32, -bnd_drv, bnd_drv)
    bias = jnp.zeros((D,), dtype=jnp.float32)      # zeros_ init

    # Parameter-shaped constants are built once here ("module init"), outside the call path.
    params = init_layer_dual_params(targets, w_err, w_drv, bias, sigma=sigma, p_reg=p_reg)

    out = layer_dual_forward(x, params)
    out = jax.block_until_ready(out)

    ref = layer_dual_reference(x, targets, w_err, w_drv, bias, sigma=sigma, p_reg=p_reg)
    assert out.shape == (B, D) and out.dtype == jnp.float32
    assert jnp.allclose(out, ref, rtol=1e-4, atol=1e-4), "mismatch vs reference"

    print("KERNEL_OK")
</pallas_src>

<mosaic_0001>
module attributes {stable_mosaic.version = 11 : i64} {
  func.func @layer_dual_kernel(%arg0: i32, %arg1: memref<128x32xf32, #tpu.memory_space<vmem>>, %arg2: memref<1x8xf32, #tpu.memory_space<vmem>>, %arg3: memref<32x264xf32, #tpu.memory_space<vmem>>, %arg4: memref<8x256xf32, #tpu.memory_space<vmem>>, %arg5: memref<8x32xf32, #tpu.memory_space<vmem>>, %arg6: memref<256x32xf32, #tpu.memory_space<vmem>>, %arg7: memref<1x32xf32, #tpu.memory_space<vmem>>, %arg8: memref<128x32xf32, #tpu.memory_space<vmem>>) attributes {dimension_semantics = [#tpu.dimension_semantics<parallel>], iteration_bounds = array<i64: 2>, scalar_prefetch = 0 : i64, scratch_operands = 0 : i64, tpu.core_type = #tpu.core_type<tc>, window_params = [{transform_indices = @transform_0, window_bounds = array<i64: 128, 32>}, {pipeline_mode = #tpu.pipeline_mode<synchronous>, transform_indices = @transform_1, window_bounds = array<i64: 1, 8>}, {pipeline_mode = #tpu.pipeline_mode<synchronous>, transform_indices = @transform_2, window_bounds = array<i64: 32, 264>}, {pipeline_mode = #tpu.pipeline_mode<synchronous>, transform_indices = @transform_3, window_bounds = array<i64: 8, 256>}, {pipeline_mode = #tpu.pipeline_mode<synchronous>, transform_indices = @transform_4, window_bounds = array<i64: 8, 32>}, {pipeline_mode = #tpu.pipeline_mode<synchronous>, transform_indices = @transform_5, window_bounds = array<i64: 256, 32>}, {pipeline_mode = #tpu.pipeline_mode<synchronous>, transform_indices = @transform_6, window_bounds = array<i64: 1, 32>}, {transform_indices = @transform_7, window_bounds = array<i64: 128, 32>}]} {
    %c0 = arith.constant 0 : index
    %c0_0 = arith.constant 0 : index
    %0 = vector.load %arg1[%c0, %c0_0] : memref<128x32xf32, #tpu.memory_space<vmem>>, vector<128x32xf32>
    %c0_1 = arith.constant 0 : index
    %c0_2 = arith.constant 0 : index
    %1 = vector.load %arg3[%c0_1, %c0_2] : memref<32x264xf32, #tpu.memory_space<vmem>>, vector<32x264xf32>
    %cst = arith.constant dense<0.000000e+00> : vector<128x264xf32>
    %2 = tpu.matmul %0, %1, %cst {dimension_numbers = #tpu.dot_dimension_numbers<[1], [0], [0], [1], [0, 0, 1, 1], [], []>} : vector<128x32xf32>, vector<32x264xf32>, vector<128x264xf32> -> vector<128x264xf32>
    %3 = vector.extract_strided_slice %2 {offsets = [0, 0], sizes = [128, 256], strides = [1, 1]} : vector<128x264xf32> to vector<128x256xf32>
    %4 = vector.extract_strided_slice %2 {offsets = [0, 256], sizes = [128, 8], strides = [1, 1]} : vector<128x264xf32> to vector<128x8xf32>
    %5 = arith.mulf %0, %0 : vector<128x32xf32>
    %cst_3 = arith.constant dense<0.000000e+00> : vector<128xf32>
    %6 = vector.multi_reduction <add>, %5, %cst_3 [1] : vector<128x32xf32> to vector<128xf32>
    %7 = vector.shape_cast %6 : vector<128xf32> to vector<128x1xf32>
    %c0_4 = arith.constant 0 : index
    %c0_5 = arith.constant 0 : index
    %8 = vector.load %arg2[%c0_4, %c0_5] : memref<1x8xf32, #tpu.memory_space<vmem>>, vector<1x8xf32>
    %9 = vector.broadcast %7 : vector<128x1xf32> to vector<128x8xf32>
    %10 = vector.broadcast %8 : vector<1x8xf32> to vector<128x8xf32>
    %11 = arith.addf %9, %10 : vector<128x8xf32>
    %cst_6 = arith.constant 2.000000e+00 : f32
    %12 = vector.broadcast %cst_6 : f32 to vector<128x8xf32>
    %13 = arith.mulf %12, %4 : vector<128x8xf32>
    %14 = arith.subf %11, %13 : vector<128x8xf32>
    %cst_7 = arith.constant 0.000000e+00 : f32
    %15 = vector.broadcast %cst_7 : f32 to vector<128x8xf32>
    %16 = arith.maximumf %14, %15 : vector<128x8xf32>
    %cst_8 = arith.constant -5.000000e-01 : f32
    %17 = vector.broadcast %cst_8 : f32 to vector<128x8xf32>
    %18 = arith.mulf %17, %16 : vector<128x8xf32>
    %19 = math.exp %18 : vector<128x8xf32>
    %c0_9 = arith.constant 0 : index
    %c0_10 = arith.constant 0 : index
    %20 = vector.load %arg4[%c0_9, %c0_10] : memref<8x256xf32, #tpu.memory_space<vmem>>, vector<8x256xf32>
    %cst_11 = arith.constant dense<0.000000e+00> : vector<128x256xf32>
    %21 = tpu.matmul %19, %20, %cst_11 {dimension_numbers = #tpu.dot_dimension_numbers<[1], [0], [0], [1], [0, 0, 1, 1], [], []>} : vector<128x8xf32>, vector<8x256xf32>, vector<128x256xf32> -> vector<128x256xf32>
    %22 = arith.mulf %21, %3 : vector<128x256xf32>
    %c0_12 = arith.constant 0 : index
    %c0_13 = arith.constant 0 : index
    %23 = vector.load %arg5[%c0_12, %c0_13] : memref<8x32xf32, #tpu.memory_space<vmem>>, vector<8x32xf32>
    %cst_14 = arith.constant dense<0.000000e+00> : vector<128x32xf32>
    %24 = tpu.matmul %19, %23, %cst_14 {dimension_numbers = #tpu.dot_dimension_numbers<[1], [0], [0], [1], [0, 0, 1, 1], [], []>} : vector<128x8xf32>, vector<8x32xf32>, vector<128x32xf32> -> vector<128x32xf32>
    %c0_15 = arith.constant 0 : index
    %c0_16 = arith.constant 0 : index
    %25 = vector.load %arg6[%c0_15, %c0_16] : memref<256x32xf32, #tpu.memory_space<vmem>>, vector<256x32xf32>
    %cst_17 = arith.constant dense<0.000000e+00> : vector<128x32xf32>
    %26 = tpu.matmul %22, %25, %cst_17 {dimension_numbers = #tpu.dot_dimension_numbers<[1], [0], [0], [1], [0, 0, 1, 1], [], []>} : vector<128x256xf32>, vector<256x32xf32>, vector<128x32xf32> -> vector<128x32xf32>
    %27 = arith.addf %24, %26 : vector<128x32xf32>
    %c0_18 = arith.constant 0 : index
    %c0_19 = arith.constant 0 : index
    %28 = vector.load %arg7[%c0_18, %c0_19] : memref<1x32xf32, #tpu.memory_space<vmem>>, vector<1x32xf32>
    %29 = vector.broadcast %28 : vector<1x32xf32> to vector<128x32xf32>
    %30 = arith.addf %27, %29 : vector<128x32xf32>
    %c0_20 = arith.constant 0 : index
    %c0_21 = arith.constant 0 : index
    %31 = vector.load %arg8[%c0_20, %c0_21] : memref<128x32xf32, #tpu.memory_space<vmem>>, vector<128x32xf32>
    tpu.vector_store %arg8[%c0_20, %c0_21], %30 {strides = array<i32>} : memref<128x32xf32, #tpu.memory_space<vmem>>, vector<128x32xf32>,
    return
  }
  func.func @transform_0(%arg0: i32) -> (i32, i32) {
    %c0_i32 = arith.constant 0 : i32
    %c0_i32_0 = arith.constant 0 : i32
    return %arg0, %c0_i32 : i32, i32
  }
  func.func @transform_1(%arg0: i32) -> (i32, i32) {
    %c0_i32 = arith.constant 0 : i32
    %c0_i32_0 = arith.constant 0 : i32
    %c0_i32_1 = arith.constant 0 : i32
    return %c0_i32, %c0_i32_0 : i32, i32
  }
  func.func @transform_2(%arg0: i32) -> (i32, i32) {
    %c0_i32 = arith.constant 0 : i32
    %c0_i32_0 = arith.constant 0 : i32
    %c0_i32_1 = arith.constant 0 : i32
    return %c0_i32, %c0_i32_0 : i32, i32
  }
  func.func @transform_3(%arg0: i32) -> (i32, i32) {
    %c0_i32 = arith.constant 0 : i32
    %c0_i32_0 = arith.constant 0 : i32
    %c0_i32_1 = arith.constant 0 : i32
    return %c0_i32, %c0_i32_0 : i32, i32
  }
  func.func @transform_4(%arg0: i32) -> (i32, i32) {
    %c0_i32 = arith.constant 0 : i32
    %c0_i32_0 = arith.constant 0 : i32
    %c0_i32_1 = arith.constant 0 : i32
    return %c0_i32, %c0_i32_0 : i32, i32
  }
  func.func @transform_5(%arg0: i32) -> (i32, i32) {
    %c0_i32 = arith.constant 0 : i32
    %c0_i32_0 = arith.constant 0 : i32
    %c0_i32_1 = arith.constant 0 : i32
    return %c0_i32, %c0_i32_0 : i32, i32
  }
  func.func @transform_6(%arg0: i32) -> (i32, i32) {
    %c0_i32 = arith.constant 0 : i32
    %c0_i32_0 = arith.constant 0 : i32
    %c0_i32_1 = arith.constant 0 : i32
    return %c0_i32, %c0_i32_0 : i32, i32
  }
  func.func @transform_7(%arg0: i32) -> (i32, i32) {
    %c0_i32 = arith.constant 0 : i32
    %c0_i32_0 = arith.constant 0 : i32
    return %arg0, %c0_i32 : i32, i32
  }
}

</mosaic_0001>

<llo_original>
// kernel: tpu_custom_call.1
$region0: #{tpu_custom_call.1}
  #allocation0 [shape = 'u32[]', space=smem, size = 0x4, offset = 0x4, fixed_abs, tag = 'smem constant byte address 0x4 - core index']
  #allocation1 [shape = 'u32[144,128]{1,0:T(1,128)}', space=vmem, size = 0x12000, scoped, tag = 'internal scratch']
  %s0 = inlined_call_operand.vmem [shape: f32[256,32], index: 0, kind: input, shape index: {}]
  %s1 = inlined_call_operand.vmem [shape: f32[1,8], index: 1, kind: input, shape index: {}]
  %s2 = inlined_call_operand.vmem [shape: f32[32,264], index: 2, kind: input, shape index: {}]
  %s3 = inlined_call_operand.vmem [shape: f32[8,256], index: 3, kind: input, shape index: {}]
  %s4 = inlined_call_operand.vmem [shape: f32[8,32], index: 4, kind: input, shape index: {}]
  %s5 = inlined_call_operand.vmem [shape: f32[256,32], index: 5, kind: input, shape index: {}]
  %s6 = inlined_call_operand.vmem [shape: f32[1,32], index: 6, kind: input, shape index: {}]
  %s7 = inlined_call_operand.vmem [shape: f32[256,32], index: 7, kind: output, shape index: {}]
  %s8 = sld [smem:[#allocation0]]
  $region61: #{tpu_custom_call.1} parent=0
    _
  %s10 = ssub.s32 1, %s8
  %s11 = scalar_select 0, %s10, %s8
  loop: start=0, step=1, limit=4
  $region2: #{tpu_custom_call.1} parent=0 // loop_pre_header
    _
  $region3: #{tpu_custom_call.1} parent=0 // loop_header
    %s13 = sphi 0, %s17
    %p14 = scmp.ge.s32.totalorder %s13, 4
    %s23 = sphi 0, %s25
    %s26 = sphi 0, %s23
    %s27 = sphi 0, %s26
    %s43 = sphi 0, %s27
    %s47 = sphi 0, %s47
    %s49 = sphi 0, %s47
    %s50 = sphi 0, %s49
    %s64 = sphi 0, %s50
    %s68 = sphi 0, %s68
    %s70 = sphi 0, %s68
    %s71 = sphi 0, %s70
    %s85 = sphi 0, %s71
    %s89 = sphi 0, %s89
    %s91 = sphi 0, %s89
    %s92 = sphi 0, %s91
    %s106 = sphi 0, %s92
    %s110 = sphi 0, %s110
    %s112 = sphi 0, %s110
    %s113 = sphi 0, %s112
    %s127 = sphi 0, %s113
    %s131 = sphi 0, %s131
    %s133 = sphi 0, %s131
    %s134 = sphi 0, %s133
    %s148 = sphi 0, %s134
    %s152 = sphi 0, %s152
    %s154 = sphi 0, %s152
    %s155 = sphi 0, %s154
    %s169 = sphi 0, %s155
    %s175 = sphi 0, %s177
    %s178 = sphi 0, %s175
    %s179 = sphi 0, %s178
    %s195 = sphi 0, %s179
  $region4: #{tpu_custom_call.1} parent=0 // loop_header_branch
    %16 = sbr.rel (%p14) target = $region8
  $region5: #{tpu_custom_call.1} parent=0 // loop_body
    %s18 = ssub.s32 %s13, 1
    %s19 = ssub.s32 %s13, 2
    %s20 = sadd.s32 %s13, 1
    %s21 = ssub.s32 %s13, %s20
    %p22 = scmp.eq.s32.totalorder %s21, 0
    %s24 = sadd.s32 %s23, 1
    %s25 = scalar_select %p22, %s23, %s24
    %p28 = pneg %p22
    %p29 = scmp.eq.s32.totalorder %s13, 1
    %p30 = por %p28, %p29
    %p31 = scmp.ne.s32.totalorder %s23, %s26
    %p32 = scmp.eq.s32.totalorder %s13, 0
    %p33 = por %p31, %p32
    %p34 = scmp.ne.s32.totalorder %s23, %s26
    %p35 = scmp.eq.s32.totalorder %s18, 1
    %p36 = por %p34, %p35
    %p37 = scmp.ne.s32.totalorder %s26, %s27
    %p38 = scmp.eq.s32.totalorder %s18, 0
    %p39 = por %p37, %p38
    %p40 = scmp.ne.s32.totalorder %s26, %s27
    %p41 = scmp.eq.s32.totalorder %s19, 1
    %p42 = por %p40, %p41
    %p44 = scmp.ne.s32.totalorder %s27, %s43
    %p45 = scmp.eq.s32.totalorder %s19, 0
    %p46 = por %p44, %p45
    %s48 = sadd.s32 %s47, 1
    %p51 = scmp.eq.s32.totalorder %s13, 1
    %p52 = scmp.ne.s32.totalorder %s47, %s49
    %p53 = scmp.eq.s32.totalorder %s13, 0
    %p54 = por %p52, %p53
    %p55 = scmp.ne.s32.totalorder %s47, %s49
    %p56 = scmp.eq.s32.totalorder %s18, 1
    %p57 = por %p55, %p56
    %p58 = scmp.ne.s32.totalorder %s49, %s50
    %p59 = scmp.eq.s32.totalorder %s18, 0
    %p60 = por %p58, %p59
    %p61 = scmp.ne.s32.totalorder %s49, %s50
    %p62 = scmp.eq.s32.totalorder %s19, 1
    %p63 = por %p61, %p62
    %p65 = scmp.ne.s32.totalorder %s50, %s64
    %p66 = scmp.eq.s32.totalorder %s19, 0
    %p67 = por %p65, %p66
    %s69 = sadd.s32 %s68, 1
    %p72 = scmp.eq.s32.totalorder %s13, 1
    %p73 = scmp.ne.s32.totalorder %s68, %s70
    %p74 = scmp.eq.s32.totalorder %s13, 0
    %p75 = por %p73, %p74
    %p76 = scmp.ne.s32.totalorder %s68, %s70
    %p77 = scmp.eq.s32.totalorder %s18, 1
    %p78 = por %p76, %p77
    %p79 = scmp.ne.s32.totalorder %s70, %s71
    %p80 = scmp.eq.s32.totalorder %s18, 0
    %p81 = por %p79, %p80
    %p82 = scmp.ne.s32.totalorder %s70, %s71
    %p83 = scmp.eq.s32.totalorder %s19, 1
    %p84 = por %p82, %p83
    %p86 = scmp.ne.s32.totalorder %s71, %s85
    %p87 = scmp.eq.s32.totalorder %s19, 0
    %p88 = por %p86, %p87
    %s90 = sadd.s32 %s89, 1
    %p93 = scmp.eq.s32.totalorder %s13, 1
    %p94 = scmp.ne.s32.totalorder %s89, %s91
    %p95 = scmp.eq.s32.totalorder %s13, 0
    %p96 = por %p94, %p95
    %p97 = scmp.ne.s32.totalorder %s89, %s91
    %p98 = scmp.eq.s32.totalorder %s18, 1
    %p99 = por %p97, %p98
    %p100 = scmp.ne.s32.totalorder %s91, %s92
    %p101 = scmp.eq.s32.totalorder %s18, 0
    %p102 = por %p100, %p101
    %p103 = scmp.ne.s32.totalorder %s91, %s92
    %p104 = scmp.eq.s32.totalorder %s19, 1
    %p105 = por %p103, %p104
    %p107 = scmp.ne.s32.totalorder %s92, %s106
    %p108 = scmp.eq.s32.totalorder %s19, 0
    %p109 = por %p107, %p108
    %s111 = sadd.s32 %s110, 1
    %p114 = scmp.eq.s32.totalorder %s13, 1
    %p115 = scmp.ne.s32.totalorder %s110, %s112
    %p116 = scmp.eq.s32.totalorder %s13, 0
    %p117 = por %p115, %p116
    %p118 = scmp.ne.s32.totalorder %s110, %s112
    %p119 = scmp.eq.s32.totalorder %s18, 1
    %p120 = por %p118, %p119
    %p121 = scmp.ne.s32.totalorder %s112, %s113
    %p122 = scmp.eq.s32.totalorder %s18, 0
    %p123 = por %p121, %p122
    %p124 = scmp.ne.s32.totalorder %s112, %s113
    %p125 = scmp.eq.s32.totalorder %s19, 1
    %p126 = por %p124, %p125
    %p128 = scmp.ne.s32.totalorder %s113, %s127
    %p129 = scmp.eq.s32.totalorder %s19, 0
    %p130 = por %p128, %p129
    %s132 = sadd.s32 %s131, 1
    %p135 = scmp.eq.s32.totalorder %s13, 1
    %p136 = scmp.ne.s32.totalorder %s131, %s133
    %p137 = scmp.eq.s32.totalorder %s13, 0
    %p138 = por %p136, %p137
    %p139 = scmp.ne.s32.totalorder %s131, %s133
    %p140 = scmp.eq.s32.totalorder %s18, 1
    %p141 = por %p139, %p140
    %p142 = scmp.ne.s32.totalorder %s133, %s134
    %p143 = scmp.eq.s32.totalorder %s18, 0
    %p144 = por %p142, %p143
    %p145 = scmp.ne.s32.totalorder %s133, %s134
    %p146 = scmp.eq.s32.totalorder %s19, 1
    %p147 = por %p145, %p146
    %p149 = scmp.ne.s32.totalorder %s134, %s148
    %p150 = scmp.eq.s32.totalorder %s19, 0
    %p151 = por %p149, %p150
    %s153 = sadd.s32 %s152, 1
    %p156 = scmp.eq.s32.totalorder %s13, 1
    %p157 = scmp.ne.s32.totalorder %s152, %s154
    %p158 = scmp.eq.s32.totalorder %s13, 0
    %p159 = por %p157, %p158
    %p160 = scmp.ne.s32.totalorder %s152, %s154
    %p161 = scmp.eq.s32.totalorder %s18, 1
    %p162 = por %p160, %p161
    %p163 = scmp.ne.s32.totalorder %s154, %s155
    %p164 = scmp.eq.s32.totalorder %s18, 0
    %p165 = por %p163, %p164
    %p166 = scmp.ne.s32.totalorder %s154, %s155
    %p167 = scmp.eq.s32.totalorder %s19, 1
    %p168 = por %p166, %p167
    %p170 = scmp.ne.s32.totalorder %s155, %s169
    %p171 = scmp.eq.s32.totalorder %s19, 0
    %p172 = por %p170, %p171
    %s173 = ssub.s32 %s13, %s20
    %p174 = scmp.eq.s32.totalorder %s173, 0
    %s176 = sadd.s32 %s175, 1
    %s177 = scalar_select %p174, %s175, %s176
    %p180 = pneg %p174
    %p181 = scmp.eq.s32.totalorder %s13, 1
    %p182 = por %p180, %p181
    %p183 = scmp.ne.s32.totalorder %s175, %s178
    %p184 = scmp.eq.s32.totalorder %s13, 0
    %p185 = por %p183, %p184
    %p186 = scmp.ne.s32.totalorder %s175, %s178
    %p187 = scmp.eq.s32.totalorder %s18, 1
    %p188 = por %p186, %p187
    %p189 = scmp.ne.s32.totalorder %s178, %s179
    %p190 = scmp.eq.s32.totalorder %s18, 0
    %p191 = por %p189, %p190
    %p192 = scmp.ne.s32.totalorder %s178, %s179
    %p193 = scmp.eq.s32.totalorder %s19, 1
    %p194 = por %p192, %p193
    %p196 = scmp.ne.s32.totalorder %s179, %s195
    %p197 = scmp.eq.s32.totalorder %s19, 0
    %p198 = por %p196, %p197
    %p199 = scmp.le.s32.totalorder 1, %s13
    %p200 = scmp.lt.s32.totalorder %s13, 3
    %p201 = pnand %p199, %p200
    %p202 = pneg %p201
    // Predicated region
    $region9: #{tpu_custom_call.1} parent=5 // pred_check
      _
    $region10: #{tpu_custom_call.1} parent=5 // pred_check_branch
      %204 = sbr.rel (%p201) target = $region12
    $region11: #{tpu_custom_call.1} parent=5 // pred_region
      %s205 = ssub.s32 %s13, 1
      // Predicated region
      $region13: #{tpu_custom_call.1} parent=11 // pred_check
        %p206 = pneg %p60
      $region14: #{tpu_custom_call.1} parent=11 // pred_check_branch
        %208 = sbr.rel (%p206) target = $region16
      $region15: #{tpu_custom_call.1} parent=11 // pred_region
        _
      $region16: #{tpu_custom_call.1} parent=11 // pred_fallthru
        _
      // Predicated region
      $region17: #{tpu_custom_call.1} parent=11 // pred_check
        %p209 = pneg %p81
      $region18: #{tpu_custom_call.1} parent=11 // pred_check_branch
        %211 = sbr.rel (%p209) target = $region20
      $region19: #{tpu_custom_call.1} parent=11 // pred_region
        _
      $region20: #{tpu_custom_call.1} parent=11 // pred_fallthru
        _
      // Predicated region
      $region21: #{tpu_custom_call.1} parent=11 // pred_check
        %p212 = pneg %p102
      $region22: #{tpu_custom_call.1} parent=11 // pred_check_branch
        %214 = sbr.rel (%p212) target = $region24
      $region23: #{tpu_custom_call.1} parent=11 // pred_region
        _
      $region24: #{tpu_custom_call.1} parent=11 // pred_fallthru
        _
      // Predicated region
      $region25: #{tpu_custom_call.1} parent=11 // pred_check
        %p215 = pneg %p123
      $region26: #{tpu_custom_call.1} parent=11 // pred_check_branch
        %217 = sbr.rel (%p215) target = $region28
      $region27: #{tpu_custom_call.1} parent=11 // pred_region
        _
      $region28: #{tpu_custom_call.1} parent=11 // pred_fallthru
        _
      // Predicated region
      $region29: #{tpu_custom_call.1} parent=11 // pred_check
        %p218 = pneg %p144
      $region30: #{tpu_custom_call.1} parent=11 // pred_check_branch
        %220 = sbr.rel (%p218) target = $region32
      $region31: #{tpu_custom_call.1} parent=11 // pred_region
        _
      $region32: #{tpu_custom_call.1} parent=11 // pred_fallthru
        _
      // Predicated region
      $region33: #{tpu_custom_call.1} parent=11 // pred_check
        %p221 = pneg %p165
      $region34: #{tpu_custom_call.1} parent=11 // pred_check_branch
        %223 = sbr.rel (%p221) target = $region36
      $region35: #{tpu_custom_call.1} parent=11 // pred_region
        _
      $region36: #{tpu_custom_call.1} parent=11 // pred_fallthru
        _
    $region12: #{tpu_custom_call.1} parent=5 // pred_fallthru
      _
    %p224 = scmp.lt.s32.totalorder %s13, 2
    // Predicated region
    $region37: #{tpu_custom_call.1} parent=5 // pred_check
      %p225 = pneg %p224
    $region38: #{tpu_custom_call.1} parent=5 // pred_check_branch
      %227 = sbr.rel (%p225) target = $region40
    $region39: #{tpu_custom_call.1} parent=5 // pred_region
      // Predicated region
      $region41: #{tpu_custom_call.1} parent=39 // pred_check
        %p228 = pneg %p33
      $region42: #{tpu_custom_call.1} parent=39 // pred_check_branch
        %230 = sbr.rel (%p228) target = $region44
      $region43: #{tpu_custom_call.1} parent=39 // pred_region
        %s231 = smul.u32 16, %s13
        %p232 = scmp.lt.s32.totalorder %s231, 31
        %s233 = scalar_select %p232, %s231, 31
        %s234 = smul.addr %s233, 8
        %s235 = scalar_lea.vmem %s0, %s234
        %s236 = smul.u32 16, %s13
      $region44: #{tpu_custom_call.1} parent=39 // pred_fallthru
        _
    $region40: #{tpu_custom_call.1} parent=5 // pred_fallthru
      _
    %p237 = scmp.le.s32.totalorder 1, %s13
    %p238 = scmp.lt.s32.totalorder %s13, 3
    %p239 = pnand %p237, %p238
    %p240 = pneg %p239
    // Predicated region
    $region45: #{tpu_custom_call.1} parent=5 // pred_check
      _
    $region46: #{tpu_custom_call.1} parent=5 // pred_check_branch
      %242 = sbr.rel (%p239) target = $region48
    $region47: #{tpu_custom_call.1} parent=5 // pred_region
      %s243 = ssub.s32 %s13, 1
      %s244 = smul.u32 16, %s18
      %p245 = scmp.lt.s32.totalorder %s244, 31
      %s246 = scalar_select %p245, %s244, 31
      %s247 = smul.addr %s246, 8
      %s248 = scalar_lea.vmem %s0, %s247
      %p249 = pneg %p39
      %p250 = pneg %p36
      %p251 = pneg %p60
      %p252 = pneg %p57
      %p253 = pneg %p81
      %p254 = pneg %p78
      %p255 = pneg %p102
      %p256 = pneg %p99
      %p257 = pneg %p123
      %p258 = pneg %p120
      %p259 = pneg %p144
      %p260 = pneg %p141
      %p261 = pneg %p165
      %p262 = pneg %p162
      %p263 = pneg %p191
      %p264 = pneg %p188
      %s265 = smul.u32 16, %s18
      %p266 = scmp.lt.s32.totalorder %s265, 31
      %s267 = scalar_select %p266, %s265, 31
      %s268 = smul.addr %s267, 8
      %s269 = scalar_lea.vmem %s7, %s268
      %s270 = smul.u32 16, %s18
      %p271 = scmp.lt.s32.totalorder %s270, 31
      %s272 = scalar_select %p271, %s270, 31
      %s273 = smul.addr %s272, 8
      %s274 = scalar_lea.vmem %s0, %s273
      %s275 = smul.u32 16, %s18
      %s276 = smul.u32 16, %s18
      %p277 = scmp.lt.s32.totalorder %s276, 31
      %s278 = scalar_select %p277, %s276, 31
      %s279 = smul.addr %s278, 8
      %s280 = scalar_lea.vmem %s7, %s279
      %s281 = smul.u32 16, %s18
      %v282 = vld [vmem:[%s274] sm:$0xff]
      %v283 = vld [vmem:[%s274 + $0x8] sm:$0xff]
      %v284 = vld [vmem:[%s274 + $0x10] sm:$0xff]
      %v285 = vld [vmem:[%s274 + $0x18] sm:$0xff]
      %v286 = vld [vmem:[%s274 + $0x20] sm:$0xff]
      %v287 = vld [vmem:[%s274 + $0x28] sm:$0xff]
      %v288 = vld [vmem:[%s274 + $0x30] sm:$0xff]
      %v289 = vld [vmem:[%s274 + $0x38] sm:$0xff]
      %v290 = vld [vmem:[%s274 + $0x40] sm:$0xff]
      %v291 = vld [vmem:[%s274 + $0x48] sm:$0xff]
      %v292 = vld [vmem:[%s274 + $0x50] sm:$0xff]
      %v293 = vld [vmem:[%s274 + $0x58] sm:$0xff]
      %v294 = vld [vmem:[%s274 + $0x60] sm:$0xff]
      %v295 = vld [vmem:[%s274 + $0x68] sm:$0xff]
      %v296 = vld [vmem:[%s274 + $0x70] sm:$0xff]
      %v297 = vld [vmem:[%s274 + $0x78] sm:$0xff]
      %v298 = vld [vmem:[%s2] sm:$0xff]
      %v299 = vld [vmem:[%s2 + $0x8] sm:$0xff]
      %v300 = vld [vmem:[%s2 + $0x10] sm:$0xff]
      %v301 = vld [vmem:[%s2 + $0x18] sm:$0xff]
      %v302 = vld [vmem:[%s2 + $0x20] sm:$0xff]
      %v303 = vld [vmem:[%s2 + $0x28] sm:$0xff]
      %v304 = vld [vmem:[%s2 + $0x30] sm:$0xff]
      %v305 = vld [vmem:[%s2 + $0x38] sm:$0xff]
      %v306 = vld [vmem:[%s2 + $0x40] sm:$0xff]
      %v307 = vld [vmem:[%s2 + $0x48] sm:$0xff]
      %v308 = vld [vmem:[%s2 + $0x50] sm:$0xff]
      %v309 = vld [vmem:[%s2 + $0x58] sm:$0xff]
      %vm310 = vcmask 261120
      %v312 = vsel %vm310, %v282, 0
      %v315 = vsel %vm310, %v283, 0
      %v318 = vsel %vm310, %v284, 0
      %v321 = vsel %vm310, %v285, 0
      %v324 = vsel %vm310, %v286, 0
      %v327 = vsel %vm310, %v287, 0
      %v330 = vsel %vm310, %v288, 0
      %v333 = vsel %vm310, %v289, 0
      %v336 = vsel %vm310, %v290, 0
      %v339 = vsel %vm310, %v291, 0
      %v342 = vsel %vm310, %v292, 0
      %v345 = vsel %vm310, %v293, 0
      %v348 = vsel %vm310, %v294, 0
      %v351 = vsel %vm310, %v295, 0
      %v354 = vsel %vm310, %v296, 0
      %v357 = vsel %vm310, %v297, 0
      %359 = vmatprep.subr.mxu0 %v299
      %360 = vmatpush1.msra.mxu0 %v298
      %361 = vmatprep.subr.mxu0 %v302
      %362 = vmatpush1.msra.mxu0 %v301
      %363 = vmatprep.subr.mxu0 %v305
      %364 = vmatpush1.msra.mxu0 %v304
      %365 = vmatprep.subr.mxu0 %v308
      %366 = vmatpush1.msra.mxu0 %v307
      %367 = vmatprep.subr.mxu0 0.0
      %368 = vmatpush1.msra.mxu0 0.0
      %369 = vmatprep.subr.mxu0 0.0
      %370 = vmatpush1.msra.mxu0 0.0
      %371 = vmatprep.subr.mxu0 0.0
      %372 = vmatpush1.msra.mxu0 0.0
      %373 = vmatprep.subr.mxu0 0.0
      %374 = vmatpush1.msra.mxu0 0.0
      %375 = vmatprep.subr.mxu0 0.0
      %376 = vmatpush1.msra.mxu0 0.0
      %377 = vmatprep.subr.mxu0 0.0
      %378 = vmatpush1.msra.mxu0 0.0
      %379 = vmatprep.subr.mxu0 0.0
      %380 = vmatpush1.msra.mxu0 0.0
      %381 = vmatprep.subr.mxu0 0.0
      %382 = vmatpush1.msra.mxu0 0.0
      %383 = vmatprep.subr.mxu0 0.0
      %384 = vmatpush1.msra.mxu0 0.0
      %385 = vmatprep.subr.mxu0 0.0
      %386 = vmatpush1.msra.mxu0 0.0
      %387 = vmatprep.subr.mxu0 0.0
      %388 = vmatpush1.msra.mxu0 0.0
      %389 = vmatprep.subr.mxu0 0.0
      %390 = vmatpush1.msra.mxu0 0.0
      %391 = vmatprep.subr.mxu0 0.0
      %392 = vmatpush1.msra.mxu0 0.0
      %393 = vmatprep.subr.mxu0 0.0
      %394 = vmatpush1.msra.mxu0 0.0
      %395 = vmatprep.subr.mxu0 0.0
      %396 = vmatpush1.msra.mxu0 0.0
      %397 = vmatprep.subr.mxu0 0.0
      %398 = vmatpush1.msra.mxu0 0.0
      %399 = vmatprep.subr.mxu0 0.0
      %400 = vmatpush1.msra.mxu0 0.0
      %401 = vmatprep.subr.mxu0 0.0
      %402 = vmatpush1.msra.mxu0 0.0
      %403 = vmatprep.subr.mxu0 0.0
      %404 = vmatpush1.msra.mxu0 0.0
      %405 = vmatprep.subr.mxu0 0.0
      %406 = vmatpush1.msra.mxu0 0.0
      %407 = vmatprep.subr.mxu0 0.0
      %408 = vmatpush1.msra.mxu0 0.0
      %409 = vmatprep.subr.mxu0 0.0
      %410 = vmatpush1.msra.mxu0 0.0
      %411 = vmatprep.subr.mxu0 0.0
      %412 = vmatpush1.msra.mxu0 0.0
      %413 = vmatprep.subr.mxu0 0.0
      %414 = vmatpush1.msra.mxu0 0.0
      %415 = vmatprep.subr.mxu0 0.0
      %416 = vmatpush1.msra.mxu0 0.0
      %417 = vmatprep.subr.mxu0 0.0
      %418 = vmatpush1.msra.mxu0 0.0
      %419 = vmatprep.subr.mxu0 0.0
      %420 = vmatpush1.msra.mxu0 0.0
      %421 = vmatprep.subr.mxu0 0.0
      %422 = vmatpush1.msra.mxu0 0.0
      %423 = vmatprep.mubr.f32.mxu0 0.0
      %424 = vmatmul.mubr.f32.gmra.mrb[0].mxu0 %v312
      %v425 = vpop.f32.mrb[0].mxu0
      %v426 = vadd.f32 0.0, %v425
      %v427 = vpop.f32.mrb[0].mxu0
      %v428 = vadd.f32 0.0, %v427
      %429 = vmatprep.mubr.f32.mxu0 0.0
      %430 = vmatmul.mubr.f32.gmra.mrb[0].mxu0 %v315
      %v431 = vpop.f32.mrb[0].mxu0
      %v432 = vadd.f32 0.0, %v431
      %v433 = vpop.f32.mrb[0].mxu0
      %v434 = vadd.f32 0.0, %v433
      %435 = vmatprep.mubr.f32.mxu0 0.0
      %436 = vmatmul.mubr.f32.gmra.mrb[0].mxu0 %v318
      %v437 = vpop.f32.mrb[0].mxu0
      %v438 = vadd.f32 0.0, %v437
      %v439 = vpop.f32.mrb[0].mxu0
      %v440 = vadd.f32 0.0, %v439
      %441 = vmatprep.mubr.f32.mxu0 0.0
      %442 = vmatmul.mubr.f32.gmra.mrb[0].mxu0 %v321
      %v443 = vpop.f32.mrb[0].mxu0
      %v444 = vadd.f32 0.0, %v443
      %v445 = vpop.f32.mrb[0].mxu0
      %v446 = vadd.f32 0.0, %v445
      %447 = vmatprep.mubr.f32.mxu0 0.0
      %448 = vmatmul.mubr.f32.gmra.mrb[0].mxu0 %v324
      %v449 = vpop.f32.mrb[0].mxu0
      %v450 = vadd.f32 0.0, %v449
      %v451 = vpop.f32.mrb[0].mxu0
      %v452 = vadd.f32 0.0, %v451
      %453 = vmatprep.mubr.f32.mxu0 0.0
      %454 = vmatmul.mubr.f32.gmra.mrb[0].mxu0 %v327
      %v455 = vpop.f32.mrb[0].mxu0
      %v456 = vadd.f32 0.0, %v455
      %v457 = vpop.f32.mrb[0].mxu0
      %v458 = vadd.f32 0.0, %v457
      %459 = vmatprep.mubr.f32.mxu0 0.0
      %460 = vmatmul.mubr.f32.gmra.mrb[0].mxu0 %v330
      %v461 = vpop.f32.mrb[0].mxu0
      %v462 = vadd.f32 0.0, %v461
      %v463 = vpop.f32.mrb[0].mxu0
      %v464 = vadd.f32 0.0, %v463
      %465 = vmatprep.mubr.f32.mxu0 0.0
      %466 = vmatmul.mubr.f32.gmra.mrb[0].mxu0 %v333
      %v467 = vpop.f32.mrb[0].mxu0
      %v468 = vadd.f32 0.0, %v467
      %v469 = vpop.f32.mrb[0].mxu0
      %v470 = vadd.f32 0.0, %v469
      %471 = vmatprep.mubr.f32.mxu0 0.0
      %472 = vmatmul.mubr.f32.gmra.mrb[0].mxu0 %v336
      %v473 = vpop.f32.mrb[0].mxu0
      %v474 = vadd.f32 0.0, %v473
      %v475 = vpop.f32.mrb[0].mxu0
      %v476 = vadd.f32 0.0, %v475
      %477 = vmatprep.mubr.f32.mxu0 0.0
      %478 = vmatmul.mubr.f32.gmra.mrb[0].mxu0 %v339
      %v479 = vpop.f32.mrb[0].mxu0
      %v480 = vadd.f32 0.0, %v479
      %v481 = vpop.f32.mrb[0].mxu0
      %v482 = vadd.f32 0.0, %v481
      %483 = vmatprep.mubr.f32.mxu0 0.0
      %484 = vmatmul.mubr.f32.gmra.mrb[0].mxu0 %v342
      %v485 = vpop.f32.mrb[0].mxu0
      %v486 = vadd.f32 0.0, %v485
      %v487 = vpop.f32.mrb[0].mxu0
      %v488 = vadd.f32 0.0, %v487
      %489 = vmatprep.mubr.f32.mxu0 0.0
      %490 = vmatmul.mubr.f32.gmra.mrb[0].mxu0 %v345
      %v491 = vpop.f32.mrb[0].mxu0
      %v492 = vadd.f32 0.0, %v491
      %v493 = vpop.f32.mrb[0].mxu0
      %v494 = vadd.f32 0.0, %v493
      %495 = vmatprep.mubr.f32.mxu0 0.0
      %496 = vmatmul.mubr.f32.gmra.mrb[0].mxu0 %v348
      %v497 = vpop.f32.mrb[0].mxu0
      %v498 = vadd.f32 0.0, %v497
      %v499 = vpop.f32.mrb[0].mxu0
      %v500 = vadd.f32 0.0, %v499
      %501 = vmatprep.mubr.f32.mxu0 0.0
      %502 = vmatmul.mubr.f32.gmra.mrb[0].mxu0 %v351
      %v503 = vpop.f32.mrb[0].mxu0
      %v504 = vadd.f32 0.0, %v503
      %v505 = vpop.f32.mrb[0].mxu0
      %v506 = vadd.f32 0.0, %v505
      %507 = vmatprep.mubr.f32.mxu0 0.0
      %508 = vmatmul.mubr.f32.gmra.mrb[0].mxu0 %v354
      %v509 = vpop.f32.mrb[0].mxu0
      %v510 = vadd.f32 0.0, %v509
      %v511 = vpop.f32.mrb[0].mxu0
      %v512 = vadd.f32 0.0, %v511
      %513 = vmatprep.mubr.f32.mxu0 0.0
      %514 = vmatmul.mubr.f32.gmra.mrb[0].mxu0 %v357
      %v515 = vpop.f32.mrb[0].mxu0
      %v516 = vadd.f32 0.0, %v515
      %v517 = vpop.f32.mrb[0].mxu0
      %v518 = vadd.f32 0.0, %v517
      %519 = vdwg.mxu0
      %520 = vmatprep.subr.mxu0 0.0
      %521 = vmatpush1.msra.mxu0 %v300
      %522 = vmatprep.subr.mxu0 0.0
      %523 = vmatpush1.msra.mxu0 %v303
      %524 = vmatprep.subr.mxu0 0.0
      %525 = vmatpush1.msra.mxu0 %v306
      %526 = vmatprep.subr.mxu0 0.0
      %527 = vmatpush1.msra.mxu0 %v309
      %528 = vmatprep.subr.mxu0 0.0
      %529 = vmatpush1.msra.mxu0 0.0
      %530 = vmatprep.subr.mxu0 0.0
      %531 = vmatpush1.msra.mxu0 0.0
      %532 = vmatprep.subr.mxu0 0.0
      %533 = vmatpush1.msra.mxu0 0.0
      %534 = vmatprep.subr.mxu0 0.0
      %535 = vmatpush1.msra.mxu0 0.0
      %536 = vmatprep.subr.mxu0 0.0
      %537 = vmatpush1.msra.mxu0 0.0
      %538 = vmatprep.subr.mxu0 0.0
      %539 = vmatpush1.msra.mxu0 0.0
      %540 = vmatprep.subr.mxu0 0.0
      %541 = vmatpush1.msra.mxu0 0.0
      %542 = vmatprep.subr.mxu0 0.0
      %543 = vmatpush1.msra.mxu0 0.0
      %544 = vmatprep.subr.mxu0 0.0
      %545 = vmatpush1.msra.mxu0 0.0
      %546 = vmatprep.subr.mxu0 0.0
      %547 = vmatpush1.msra.mxu0 0.0
      %548 = vmatprep.subr.mxu0 0.0
      %549 = vmatpush1.msra.mxu0 0.0
      %550 = vmatprep.subr.mxu0 0.0
      %551 = vmatpush1.msra.mxu0 0.0
      %552 = vmatprep.subr.mxu0 0.0
      %553 = vmatpush1.msra.mxu0 0.0
      %554 = vmatprep.subr.mxu0 0.0
      %555 = vmatpush1.msra.mxu0 0.0
      %556 = vmatprep.subr.mxu0 0.0
      %557 = vmatpush1.msra.mxu0 0.0
      %558 = vmatprep.subr.mxu0 0.0
      %559 = vmatpush1.msra.mxu0 0.0
      %560 = vmatprep.subr.mxu0 0.0
      %561 = vmatpush1.msra.mxu0 0.0
      %562 = vmatprep.subr.mxu0 0.0
      %563 = vmatpush1.msra.mxu0 0.0
      %564 = vmatprep.subr.mxu0 0.0
      %565 = vmatpush1.msra.mxu0 0.0
      %566 = vmatprep.subr.mxu0 0.0
      %567 = vmatpush1.msra.mxu0 0.0
      %568 = vmatprep.subr.mxu0 0.0
      %569 = vmatpush1.msra.mxu0 0.0
      %570 = vmatprep.subr.mxu0 0.0
      %571 = vmatpush1.msra.mxu0 0.0
      %572 = vmatprep.subr.mxu0 0.0
      %573 = vmatpush1.msra.mxu0 0.0
      %574 = vmatprep.subr.mxu0 0.0
      %575 = vmatpush1.msra.mxu0 0.0
      %576 = vmatprep.subr.mxu0 0.0
      %577 = vmatpush1.msra.mxu0 0.0
      %578 = vmatprep.subr.mxu0 0.0
      %579 = vmatpush1.msra.mxu0 0.0
      %580 = vmatprep.subr.mxu0 0.0
      %581 = vmatpush1.msra.mxu0 0.0
      %582 = vmatprep.subr.mxu0 0.0
      %583 = vmatpush1.msra.mxu0 0.0
      %584 = vmatprep.mubr.f32.mxu0 0.0
      %585 = vmatmul.mubr.f32.gmra.mrb[0].mxu0 %v312
      %v586 = vpop.f32.mrb[0].mxu0
      %v587 = vadd.f32 0.0, %v586
      %v588 = vpop.f32.mrb[0].mxu0
      %589 = vmatprep.mubr.f32.mxu0 0.0
      %590 = vmatmul.mubr.f32.gmra.mrb[0].mxu0 %v315
      %v591 = vpop.f32.mrb[0].mxu0
      %v592 = vadd.f32 0.0, %v591
      %v593 = vpop.f32.mrb[0].mxu0
      %594 = vmatprep.mubr.f32.mxu0 0.0
      %595 = vmatmul.mubr.f32.gmra.mrb[0].mxu0 %v318
      %v596 = vpop.f32.mrb[0].mxu0
      %v597 = vadd.f32 0.0, %v596
      %v598 = vpop.f32.mrb[0].mxu0
      %599 = vmatprep.mubr.f32.mxu0 0.0
      %600 = vmatmul.mubr.f32.gmra.mrb[0].mxu0 %v321
      %v601 = vpop.f32.mrb[0].mxu0
      %v602 = vadd.f32 0.0, %v601
      %v603 = vpop.f32.mrb[0].mxu0
      %604 = vmatprep.mubr.f32.mxu0 0.0
      %605 = vmatmul.mubr.f32.gmra.mrb[0].mxu0 %v324
      %v606 = vpop.f32.mrb[0].mxu0
      %v607 = vadd.f32 0.0, %v606
      %v608 = vpop.f32.mrb[0].mxu0
      %609 = vmatprep.mubr.f32.mxu0 0.0
      %610 = vmatmul.mubr.f32.gmra.mrb[0].mxu0 %v327
      %v611 = vpop.f32.mrb[0].mxu0
      %v612 = vadd.f32 0.0, %v611
      %v613 = vpop.f32.mrb[0].mxu0
      %614 = vmatprep.mubr.f32.mxu0 0.0
      %615 = vmatmul.mubr.f32.gmra.mrb[0].mxu0 %v330
      %v616 = vpop.f32.mrb[0].mxu0
      %v617 = vadd.f32 0.0, %v616
      %v618 = vpop.f32.mrb[0].mxu0
      %619 = vmatprep.mubr.f32.mxu0 0.0
      %620 = vmatmul.mubr.f32.gmra.mrb[0].mxu0 %v333
      %v621 = vpop.f32.mrb[0].mxu0
      %v622 = vadd.f32 0.0, %v621
      %v623 = vpop.f32.mrb[0].mxu0
      %624 = vmatprep.mubr.f32.mxu0 0.0
      %625 = vmatmul.mubr.f32.gmra.mrb[0].mxu0 %v336
      %v626 = vpop.f32.mrb[0].mxu0
      %v627 = vadd.f32 0.0, %v626
      %v628 = vpop.f32.mrb[0].mxu0
      %629 = vmatprep.mubr.f32.mxu0 0.0
      %630 = vmatmul.mubr.f32.gmra.mrb[0].mxu0 %v339
      %v631 = vpop.f32.mrb[0].mxu0
      %v632 = vadd.f32 0.0, %v631
      %v633 = vpop.f32.mrb[0].mxu0
      %634 = vmatprep.mubr.f32.mxu0 0.0
      %635 = vmatmul.mubr.f32.gmra.mrb[0].mxu0 %v342
      %v636 = vpop.f32.mrb[0].mxu0
      %v637 = vadd.f32 0.0, %v636
      %v638 = vpop.f32.mrb[0].mxu0
      %639 = vmatprep.mubr.f32.mxu0 0.0
      %640 = vmatmul.mubr.f32.gmra.mrb[0].mxu0 %v345
      %v641 = vpop.f32.mrb[0].mxu0
      %v642 = vadd.f32 0.0, %v641
      %v643 = vpop.f32.mrb[0].mxu0
      %644 = vmatprep.mubr.f32.mxu0 0.0
      %645 = vmatmul.mubr.f32.gmra.mrb[0].mxu0 %v348
      %v646 = vpop.f32.mrb[0].mxu0
      %v647 = vadd.f32 0.0, %v646
      %v648 = vpop.f32.mrb[0].mxu0
      %649 = vmatprep.mubr.f32.mxu0 0.0
      %650 = vmatmul.mubr.f32.gmra.mrb[0].mxu0 %v351
      %v651 = vpop.f32.mrb[0].mxu0
      %v652 = vadd.f32 0.0, %v651
      %v653 = vpop.f32.mrb[0].mxu0
      %654 = vmatprep.mubr.f32.mxu0 0.0
      %655 = vmatmul.mubr.f32.gmra.mrb[0].mxu0 %v354
      %v656 = vpop.f32.mrb[0].mxu0
      %v657 = vadd.f32 0.0, %v656
      %v658 = vpop.f32.mrb[0].mxu0
      %659 = vmatprep.mubr.f32.mxu0 0.0
      %660 = vmatmul.mubr.f32.gmra.mrb[0].mxu0 %v357
      %v661 = vpop.f32.mrb[0].mxu0
      %v662 = vadd.f32 0.0, %v661
      %v663 = vpop.f32.mrb[0].mxu0
      %664 = vdwg.mxu0
      %v665 = vmul.f32 %v282, %v282
      %v666 = vmul.f32 %v283, %v283
      %v667 = vmul.f32 %v284, %v284
      %v668 = vmul.f32 %v285, %v285
      %v669 = vmul.f32 %v286, %v286
      %v670 = vmul.f32 %v287, %v287
      %v671 = vmul.f32 %v288, %v288
      %v672 = vmul.f32 %v289, %v289
      %v673 = vmul.f32 %v290, %v290
      %v674 = vmul.f32 %v291, %v291
      %v675 = vmul.f32 %v292, %v292
      %v676 = vmul.f32 %v293, %v293
      %v677 = vmul.f32 %v294, %v294
      %v678 = vmul.f32 %v295, %v295
      %v679 = vmul.f32 %v296, %v296
      %v680 = vmul.f32 %v297, %v297
      %v681 = vsel %vm310, %v665, 0.0
      %682 = vadd.xlane.f32.xlu0 %v681
      %v683 = vpop.xlane.xlu0 %682
      %v684 = vsel %vm310, %v666, 0.0
      %685 = vadd.xlane.f32.xlu0 %v684
      %v686 = vpop.xlane.xlu0 %685
      %v687 = vsel %vm310, %v667, 0.0
      %688 = vadd.xlane.f32.xlu0 %v687
      %v689 = vpop.xlane.xlu0 %688
      %v690 = vsel %vm310, %v668, 0.0
      %691 = vadd.xlane.f32.xlu0 %v690
      %v692 = vpop.xlane.xlu0 %691
      %v693 = vsel %vm310, %v669, 0.0
      %694 = vadd.xlane.f32.xlu0 %v693
      %v695 = vpop.xlane.xlu0 %694
      %v696 = vsel %vm310, %v670, 0.0
      %697 = vadd.xlane.f32.xlu0 %v696
      %v698 = vpop.xlane.xlu0 %697
      %v699 = vsel %vm310, %v671, 0.0
      %700 = vadd.xlane.f32.xlu0 %v699
      %v701 = vpop.xlane.xlu0 %700
      %v702 = vsel %vm310, %v672, 0.0
      %703 = vadd.xlane.f32.xlu0 %v702
      %v704 = vpop.xlane.xlu0 %703
      %v705 = vsel %vm310, %v673, 0.0
      %706 = vadd.xlane.f32.xlu0 %v705
      %v707 = vpop.xlane.xlu0 %706
      %v708 = vsel %vm310, %v674, 0.0
      %709 = vadd.xlane.f32.xlu0 %v708
      %v710 = vpop.xlane.xlu0 %709
      %v711 = vsel %vm310, %v675, 0.0
      %712 = vadd.xlane.f32.xlu0 %v711
      %v713 = vpop.xlane.xlu0 %712
      %v714 = vsel %vm310, %v676, 0.0
      %715 = vadd.xlane.f32.xlu0 %v714
      %v716 = vpop.xlane.xlu0 %715
      %v717 = vsel %vm310, %v677, 0.0
      %718 = vadd.xlane.f32.xlu0 %v717
      %v719 = vpop.xlane.xlu0 %718
      %v720 = vsel %vm310, %v678, 0.0
      %721 = vadd.xlane.f32.xlu0 %v720
      %v722 = vpop.xlane.xlu0 %721
      %v723 = vsel %vm310, %v679, 0.0
      %724 = vadd.xlane.f32.xlu0 %v723
      %v725 = vpop.xlane.xlu0 %724
      %v726 = vsel %vm310, %v680, 0.0
      %727 = vadd.xlane.f32.xlu0 %v726
      %v728 = vpop.xlane.xlu0 %727
      %v729 = vld [vmem:[%s1] sm:$0x1]
      %v731 = vlaneseq
      %v732 = vshrl.u32 %v731, 7
      %v733 = vsub.s32 0, %v732
      %v734 = vrot.slane %v729, %v733
      %v736 = vadd.f32 %v683, %v734
      %v737 = vadd.f32 %v686, %v734
      %v738 = vadd.f32 %v689, %v734
      %v739 = vadd.f32 %v692, %v734
      %v740 = vadd.f32 %v695, %v734
      %v741 = vadd.f32 %v698, %v734
      %v742 = vadd.f32 %v701, %v734
      %v743 = vadd.f32 %v704, %v734
      %v744 = vadd.f32 %v707, %v734
      %v745 = vadd.f32 %v710, %v734
      %v746 = vadd.f32 %v713, %v734
      %v747 = vadd.f32 %v716, %v734
      %v748 = vadd.f32 %v719, %v734
      %v749 = vadd.f32 %v722, %v734
      %v750 = vadd.f32 %v725, %v734
      %v751 = vadd.f32 %v728, %v734
      %v752 = vmul.f32 %v587, 2.0
      %v753 = vmul.f32 %v592, 2.0
      %v754 = vmul.f32 %v597, 2.0
      %v755 = vmul.f32 %v602, 2.0
      %v756 = vmul.f32 %v607, 2.0
      %v757 = vmul.f32 %v612, 2.0
      %v758 = vmul.f32 %v617, 2.0
      %v759 = vmul.f32 %v622, 2.0
      %v760 = vmul.f32 %v627, 2.0
      %v761 = vmul.f32 %v632, 2.0
      %v762 = vmul.f32 %v637, 2.0
      %v763 = vmul.f32 %v642, 2.0
      %v764 = vmul.f32 %v647, 2.0
      %v765 = vmul.f32 %v652, 2.0
      %v766 = vmul.f32 %v657, 2.0
      %v767 = vmul.f32 %v662, 2.0
      %v768 = vsub.f32 %v736, %v752
      %v769 = vsub.f32 %v737, %v753
      %v770 = vsub.f32 %v738, %v754
      %v771 = vsub.f32 %v739, %v755
      %v772 = vsub.f32 %v740, %v756
      %v773 = vsub.f32 %v741, %v757
      %v774 = vsub.f32 %v742, %v758
      %v775 = vsub.f32 %v743, %v759
      %v776 = vsub.f32 %v744, %v760
      %v777 = vsub.f32 %v745, %v761
      %v778 = vsub.f32 %v746, %v762
      %v779 = vsub.f32 %v747, %v763
      %v780 = vsub.f32 %v748, %v764
      %v781 = vsub.f32 %v749, %v765
      %v782 = vsub.f32 %v750, %v766
      %v783 = vsub.f32 %v751, %v767
      %v784 = vmax.f32 %v768, 0.0
      %v785 = vmax.f32 %v769, 0.0
      %v786 = vmax.f32 %v770, 0.0
      %v787 = vmax.f32 %v771, 0.0
      %v788 = vmax.f32 %v772, 0.0
      %v789 = vmax.f32 %v773, 0.0
      %v790 = vmax.f32 %v774, 0.0
      %v791 = vmax.f32 %v775, 0.0
      %v792 = vmax.f32 %v776, 0.0
      %v793 = vmax.f32 %v777, 0.0
      %v794 = vmax.f32 %v778, 0.0
      %v795 = vmax.f32 %v779, 0.0
      %v796 = vmax.f32 %v780, 0.0
      %v797 = vmax.f32 %v781, 0.0
      %v798 = vmax.f32 %v782, 0.0
      %v799 = vmax.f32 %v783, 0.0
      %v800 = vmul.f32 %v784, -0.5
      %v801 = vmul.f32 %v785, -0.5
      %v802 = vmul.f32 %v786, -0.5
      %v803 = vmul.f32 %v787, -0.5
      %v804 = vmul.f32 %v788, -0.5
      %v805 = vmul.f32 %v789, -0.5
      %v806 = vmul.f32 %v790, -0.5
      %v807 = vmul.f32 %v791, -0.5
      %v808 = vmul.f32 %v792, -0.5
      %v809 = vmul.f32 %v793, -0.5
      %v810 = vmul.f32 %v794, -0.5
      %v811 = vmul.f32 %v795, -0.5
      %v812 = vmul.f32 %v796, -0.5
      %v813 = vmul.f32 %v797, -0.5
      %v814 = vmul.f32 %v798, -0.5
      %v815 = vmul.f32 %v799, -0.5
      %v816 = vmul.f32 %v800, 1.442695
      %v817 = vpow.pop %v816
      %v818 = vmul.f32 %v801, 1.442695
      %v819 = vpow.pop %v818
      %v820 = vmul.f32 %v802, 1.442695
      %v821 = vpow.pop %v820
      %v822 = vmul.f32 %v803, 1.442695
      %v823 = vpow.pop %v822
      %v824 = vmul.f32 %v804, 1.442695
      %v825 = vpow.pop %v824
      %v826 = vmul.f32 %v805, 1.442695
      %v827 = vpow.pop %v826
      %v828 = vmul.f32 %v806, 1.442695
      %v829 = vpow.pop %v828
      %v830 = vmul.f32 %v807, 1.442695
      %v831 = vpow.pop %v830
      %v832 = vmul.f32 %v808, 1.442695
      %v833 = vpow.pop %v832
      %v834 = vmul.f32 %v809, 1.442695
      %v835 = vpow.pop %v834
      %v836 = vmul.f32 %v810, 1.442695
      %v837 = vpow.pop %v836
      %v838 = vmul.f32 %v811, 1.442695
      %v839 = vpow.pop %v838
      %v840 = vmul.f32 %v812, 1.442695
      %v841 = vpow.pop %v840
      %v842 = vmul.f32 %v813, 1.442695
      %v843 = vpow.pop %v842
      %v844 = vmul.f32 %v814, 1.442695
      %v845 = vpow.pop %v844
      %v846 = vmul.f32 %v815, 1.442695
      %v847 = vpow.pop %v846
      %v848 = vld [vmem:[%s3] sm:$0xff]
      %v849 = vld [vmem:[%s3 + $0x8] sm:$0xff]
      %vm850 = vcmask 64512
      %v852 = vsel %vm850, %v817, 0
      %v855 = vsel %vm850, %v819, 0
      %v858 = vsel %vm850, %v821, 0
      %v861 = vsel %vm850, %v823, 0
      %v864 = vsel %vm850, %v825, 0
      %v867 = vsel %vm850, %v827, 0
      %v870 = vsel %vm850, %v829, 0
      %v873 = vsel %vm850, %v831, 0
      %v876 = vsel %vm850, %v833, 0
      %v879 = vsel %vm850, %v835, 0
      %v882 = vsel %vm850, %v837, 0
      %v885 = vsel %vm850, %v839, 0
      %v888 = vsel %vm850, %v841, 0
      %v891 = vsel %vm850, %v843, 0
      %v894 = vsel %vm850, %v845, 0
      %v897 = vsel %vm850, %v847, 0
      %899 = vmatprep.subr.mxu0 %v849
      %900 = vmatpush1.msra.mxu0 %v848
      %901 = vmatprep.subr.mxu0 0.0
      %902 = vmatpush1.msra.mxu0 0.0
      %903 = vmatprep.subr.mxu0 0.0
      %904 = vmatpush1.msra.mxu0 0.0
      %905 = vmatprep.subr.mxu0 0.0
      %906 = vmatpush1.msra.mxu0 0.0
      %907 = vmatprep.subr.mxu0 0.0
      %908 = vmatpush1.msra.mxu0 0.0
      %909 = vmatprep.subr.mxu0 0.0
      %910 = vmatpush1.msra.mxu0 0.0
      %911 = vmatprep.subr.mxu0 0.0
      %912 = vmatpush1.msra.mxu0 0.0
      %913 = vmatprep.subr.mxu0 0.0
      %914 = vmatpush1.msra.mxu0 0.0
      %915 = vmatprep.subr.mxu0 0.0
      %916 = vmatpush1.msra.mxu0 0.0
      %917 = vmatprep.subr.mxu0 0.0
      %918 = vmatpush1.msra.mxu0 0.0
      %919 = vmatprep.subr.mxu0 0.0
      %920 = vmatpush1.msra.mxu0 0.0
      %921 = vmatprep.subr.mxu0 0.0
      %922 = vmatpush1.msra.mxu0 0.0
      %923 = vmatprep.subr.mxu0 0.0
      %924 = vmatpush1.msra.mxu0 0.0
      %925 = vmatprep.subr.mxu0 0.0
      %926 = vmatpush1.msra.mxu0 0.0
      %927 = vmatprep.subr.mxu0 0.0
      %928 = vmatpush1.msra.mxu0 0.0
      %929 = vmatprep.subr.mxu0 0.0
      %930 = vmatpush1.msra.mxu0 0.0
      %931 = vmatprep.subr.mxu0 0.0
      %932 = vmatpush1.msra.mxu0 0.0
      %933 = vmatprep.subr.mxu0 0.0
      %934 = vmatpush1.msra.mxu0 0.0
      %935 = vmatprep.subr.mxu0 0.0
      %936 = vmatpush1.msra.mxu0 0.0
      %937 = vmatprep.subr.mxu0 0.0
      %938 = vmatpush1.msra.mxu0 0.0
      %939 = vmatprep.subr.mxu0 0.0
      %940 = vmatpush1.msra.mxu0 0.0
      %941 = vmatprep.subr.mxu0 0.0
      %942 = vmatpush1.msra.mxu0 0.0
      %943 = vmatprep.subr.mxu0 0.0
      %944 = vmatpush1.msra.mxu0 0.0
      %945 = vmatprep.subr.mxu0 0.0
      %946 = vmatpush1.msra.mxu0 0.0
      %947 = vmatprep.subr.mxu0 0.0
      %948 = vmatpush1.msra.mxu0 0.0
      %949 = vmatprep.subr.mxu0 0.0
      %950 = vmatpush1.msra.mxu0 0.0
      %951 = vmatprep.subr.mxu0 0.0
      %952 = vmatpush1.msra.mxu0 0.0
      %953 = vmatprep.subr.mxu0 0.0
      %954 = vmatpush1.msra.mxu0 0.0
      %955 = vmatprep.subr.mxu0 0.0
      %956 = vmatpush1.msra.mxu0 0.0
      %957 = vmatprep.subr.mxu0 0.0
      %958 = vmatpush1.msra.mxu0 0.0
      %959 = vmatprep.subr.mxu0 0.0
      %960 = vmatpush1.msra.mxu0 0.0
      %961 = vmatprep.subr.mxu0 0.0
      %962 = vmatpush1.msra.mxu0 0.0
      %963 = vmatprep.mubr.f32.mxu0 0.0
      %964 = vmatmul.mubr.f32.gmra.mrb[0].mxu0 %v852
      %v965 = vpop.f32.mrb[0].mxu0
      %v966 = vadd.f32 0.0, %v965
      %v967 = vpop.f32.mrb[0].mxu0
      %v968 = vadd.f32 0.0, %v967
      %969 = vmatprep.mubr.f32.mxu0 0.0
      %970 = vmatmul.mubr.f32.gmra.mrb[0].mxu0 %v855
      %v971 = vpop.f32.mrb[0].mxu0
      %v972 = vadd.f32 0.0, %v971
      %v973 = vpop.f32.mrb[0].mxu0
      %v974 = vadd.f32 0.0, %v973
      %975 = vmatprep.mubr.f32.mxu0 0.0
      %976 = vmatmul.mubr.f32.gmra.mrb[0].mxu0 %v858
      %v977 = vpop.f32.mrb[0].mxu0
      %v978 = vadd.f32 0.0, %v977
      %v979 = vpop.f32.mrb[0].mxu0
      %v980 = vadd.f32 0.0, %v979
      %981 = vmatprep.mubr.f32.mxu0 0.0
      %982 = vmatmul.mubr.f32.gmra.mrb[0].mxu0 %v861
      %v983 = vpop.f32.mrb[0].mxu0
      %v984 = vadd.f32 0.0, %v983
      %v985 = vpop.f32.mrb[0].mxu0
      %v986 = vadd.f32 0.0, %v985
      %987 = vmatprep.mubr.f32.mxu0 0.0
      %988 = vmatmul.mubr.f32.gmra.mrb[0].mxu0 %v864
      %v989 = vpop.f32.mrb[0].mxu0
      %v990 = vadd.f32 0.0, %v989
      %v991 = vpop.f32.mrb[0].mxu0
      %v992 = vadd.f32 0.0, %v991
      %993 = vmatprep.mubr.f32.mxu0 0.0
      %994 = vmatmul.mubr.f32.gmra.mrb[0].mxu0 %v867
      %v995 = vpop.f32.mrb[0].mxu0
      %v996 = vadd.f32 0.0, %v995
      %v997 = vpop.f32.mrb[0].mxu0
      %v998 = vadd.f32 0.0, %v997
      %999 = vmatprep.mubr.f32.mxu0 0.0
      %1000 = vmatmul.mubr.f32.gmra.mrb[0].mxu0 %v870
      %v1001 = vpop.f32.mrb[0].mxu0
      %v1002 = vadd.f32 0.0, %v1001
      %v1003 = vpop.f32.mrb[0].mxu0
      %v1004 = vadd.f32 0.0, %v1003
      %1005 = vmatprep.mubr.f32.mxu0 0.0
      %1006 = vmatmul.mubr.f32.gmra.mrb[0].mxu0 %v873
      %v1007 = vpop.f32.mrb[0].mxu0
      %v1008 = vadd.f32 0.0, %v1007
      %v1009 = vpop.f32.mrb[0].mxu0
      %v1010 = vadd.f32 0.0, %v1009
      %1011 = vmatprep.mubr.f32.mxu0 0.0
      %1012 = vmatmul.mubr.f32.gmra.mrb[0].mxu0 %v876
      %v1013 = vpop.f32.mrb[0].mxu0
      %v1014 = vadd.f32 0.0, %v1013
      %v1015 = vpop.f32.mrb[0].mxu0
      %v1016 = vadd.f32 0.0, %v1015
      %1017 = vmatprep.mubr.f32.mxu0 0.0
      %1018 = vmatmul.mubr.f32.gmra.mrb[0].mxu0 %v879
      %v1019 = vpop.f32.mrb[0].mxu0
      %v1020 = vadd.f32 0.0, %v1019
      %v1021 = vpop.f32.mrb[0].mxu0
      %v1022 = vadd.f32 0.0, %v1021
      %1023 = vmatprep.mubr.f32.mxu0 0.0
      %1024 = vmatmul.mubr.f32.gmra.mrb[0].mxu0 %v882
      %v1025 = vpop.f32.mrb[0].mxu0
      %v1026 = vadd.f32 0.0, %v1025
      %v1027 = vpop.f32.mrb[0].mxu0
      %v1028 = vadd.f32 0.0, %v1027
      %1029 = vmatprep.mubr.f32.mxu0 0.0
      %1030 = vmatmul.mubr.f32.gmra.mrb[0].mxu0 %v885
      %v1031 = vpop.f32.mrb[0].mxu0
      %v1032 = vadd.f32 0.0, %v1031
      %v1033 = vpop.f32.mrb[0].mxu0
      %v1034 = vadd.f32 0.0, %v1033
      %1035 = vmatprep.mubr.f32.mxu0 0.0
      %1036 = vmatmul.mubr.f32.gmra.mrb[0].mxu0 %v888
      %v1037 = vpop.f32.mrb[0].mxu0
      %v1038 = vadd.f32 0.0, %v1037
      %v1039 = vpop.f32.mrb[0].mxu0
      %v1040 = vadd.f32 0.0, %v1039
      %1041 = vmatprep.mubr.f32.mxu0 0.0
      %1042 = vmatmul.mubr.f32.gmra.mrb[0].mxu0 %v891
      %v1043 = vpop.f32.mrb[0].mxu0
      %v1044 = vadd.f32 0.0, %v1043
      %v1045 = vpop.f32.mrb[0].mxu0
      %v1046 = vadd.f32 0.0, %v1045
      %1047 = vmatprep.mubr.f32.mxu0 0.0
      %1048 = vmatmul.mubr.f32.gmra.mrb[0].mxu0 %v894
      %v1049 = vpop.f32.mrb[0].mxu0
      %v1050 = vadd.f32 0.0, %v1049
      %v1051 = vpop.f32.mrb[0].mxu0
      %v1052 = vadd.f32 0.0, %v1051
      %1053 = vmatprep.mubr.f32.mxu0 0.0
      %1054 = vmatmul.mubr.f32.gmra.mrb[0].mxu0 %v897
      %v1055 = vpop.f32.mrb[0].mxu0
      %v1056 = vadd.f32 0.0, %v1055
      %v1057 = vpop.f32.mrb[0].mxu0
      %v1058 = vadd.f32 0.0, %v1057
      %1059 = vdwg.mxu0
      %v1060 = vmul.f32 %v966, %v426
      %v1061 = vmul.f32 %v968, %v428
      %v1062 = vmul.f32 %v972, %v432
      %v1063 = vmul.f32 %v974, %v434
      %v1064 = vmul.f32 %v978, %v438
      %v1065 = vmul.f32 %v980, %v440
      %v1066 = vmul.f32 %v984, %v444
      %v1067 = vmul.f32 %v986, %v446
      %v1068 = vmul.f32 %v990, %v450
      %v1069 = vmul.f32 %v992, %v452
      %v1070 = vmul.f32 %v996, %v456
      %v1071 = vmul.f32 %v998, %v458
      %v1072 = vmul.f32 %v1002, %v462
      %v1073 = vmul.f32 %v1004, %v464
      %v1074 = vmul.f32 %v1008, %v468
      %v1075 = vmul.f32 %v1010, %v470
      %v1076 = vmul.f32 %v1014, %v474
      %v1077 = vmul.f32 %v1016, %v476
      %v1078 = vmul.f32 %v1020, %v480
      %v1079 = vmul.f32 %v1022, %v482
      %v1080 = vmul.f32 %v1026, %v486
      %v1081 = vmul.f32 %v1028, %v488
      %v1082 = vmul.f32 %v1032, %v492
      %v1083 = vmul.f32 %v1034, %v494
      %v1084 = vmul.f32 %v1038, %v498
      %v1085 = vmul.f32 %v1040, %v500
      %v1086 = vmul.f32 %v1044, %v504
      %v1087 = vmul.f32 %v1046, %v506
      %v1088 = vmul.f32 %v1050, %v510
      %v1089 = vmul.f32 %v1052, %v512
      %v1090 = vmul.f32 %v1056, %v516
      %v1091 = vmul.f32 %v1058, %v518
      %v1092 = vld [vmem:[%s4] sm:$0xff]
      %v1093 = vld [vmem:[%s5] sm:$0xff]
      %v1094 = vld [vmem:[%s5 + $0x8] sm:$0xff]
      %v1095 = vld [vmem:[%s5 + $0x10] sm:$0xff]
      %v1096 = vld [vmem:[%s5 + $0x18] sm:$0xff]
      %v1097 = vld [vmem:[%s5 + $0x20] sm:$0xff]
      %v1098 = vld [vmem:[%s5 + $0x28] sm:$0xff]
      %v1099 = vld [vmem:[%s5 + $0x30] sm:$0xff]
      %v1100 = vld [vmem:[%s5 + $0x38] sm:$0xff]
      %v1101 = vld [vmem:[%s5 + $0x40] sm:$0xff]
      %v1102 = vld [vmem:[%s5 + $0x48] sm:$0xff]
      %v1103 = vld [vmem:[%s5 + $0x50] sm:$0xff]
      %v1104 = vld [vmem:[%s5 + $0x58] sm:$0xff]
      %v1105 = vld [vmem:[%s5 + $0x60] sm:$0xff]
      %v1106 = vld [vmem:[%s5 + $0x68] sm:$0xff]
      %v1107 = vld [vmem:[%s5 + $0x70] sm:$0xff]
      %v1108 = vld [vmem:[%s5 + $0x78] sm:$0xff]
      %v1109 = vld [vmem:[%s5 + $0x80] sm:$0xff]
      %v1110 = vld [vmem:[%s5 + $0x88] sm:$0xff]
      %v1111 = vld [vmem:[%s5 + $0x90] sm:$0xff]
      %v1112 = vld [vmem:[%s5 + $0x98] sm:$0xff]
      %v1113 = vld [vmem:[%s5 + $0xa0] sm:$0xff]
      %v1114 = vld [vmem:[%s5 + $0xa8] sm:$0xff]
      %v1115 = vld [vmem:[%s5 + $0xb0] sm:$0xff]
      %v1116 = vld [vmem:[%s5 + $0xb8] sm:$0xff]
      %v1117 = vld [vmem:[%s5 + $0xc0] sm:$0xff]
      %v1118 = vld [vmem:[%s5 + $0xc8] sm:$0xff]
      %v1119 = vld [vmem:[%s5 + $0xd0] sm:$0xff]
      %v1120 = vld [vmem:[%s5 + $0xd8] sm:$0xff]
      %v1121 = vld [vmem:[%s5 + $0xe0] sm:$0xff]
      %v1122 = vld [vmem:[%s5 + $0xe8] sm:$0xff]
      %v1123 = vld [vmem:[%s5 + $0xf0] sm:$0xff]
      %v1124 = vld [vmem:[%s5 + $0xf8] sm:$0xff]
      %1125 = vmatprep.subr.mxu0 0.0
      %1126 = vmatpush1.msra.mxu0 %v1093
      %1127 = vmatprep.subr.mxu0 0.0
      %1128 = vmatpush1.msra.mxu0 %v1094
      %1129 = vmatprep.subr.mxu0 0.0
      %1130 = vmatpush1.msra.mxu0 %v1095
      %1131 = vmatprep.subr.mxu0 0.0
      %1132 = vmatpush1.msra.mxu0 %v1096
      %1133 = vmatprep.subr.mxu0 0.0
      %1134 = vmatpush1.msra.mxu0 %v1097
      %1135 = vmatprep.subr.mxu0 0.0
      %1136 = vmatpush1.msra.mxu0 %v1098
      %1137 = vmatprep.subr.mxu0 0.0
      %1138 = vmatpush1.msra.mxu0 %v1099
      %1139 = vmatprep.subr.mxu0 0.0
      %1140 = vmatpush1.msra.mxu0 %v1100
      %1141 = vmatprep.subr.mxu0 0.0
      %1142 = vmatpush1.msra.mxu0 %v1101
      %1143 = vmatprep.subr.mxu0 0.0
      %1144 = vmatpush1.msra.mxu0 %v1102
      %1145 = vmatprep.subr.mxu0 0.0
      %1146 = vmatpush1.msra.mxu0 %v1103
      %1147 = vmatprep.subr.mxu0 0.0
      %1148 = vmatpush1.msra.mxu0 %v1104
      %1149 = vmatprep.subr.mxu0 0.0
      %1150 = vmatpush1.msra.mxu0 %v1105
      %1151 = vmatprep.subr.mxu0 0.0
      %1152 = vmatpush1.msra.mxu0 %v1106
      %1153 = vmatprep.subr.mxu0 0.0
      %1154 = vmatpush1.msra.mxu0 %v1107
      %1155 = vmatprep.subr.mxu0 0.0
      %1156 = vmatpush1.msra.mxu0 %v1108
      %1157 = vmatprep.subr.mxu0 0.0
      %1158 = vmatpush1.msra.mxu0 %v1109
      %1159 = vmatprep.subr.mxu0 0.0
      %1160 = vmatpush1.msra.mxu0 %v1110
      %1161 = vmatprep.subr.mxu0 0.0
      %1162 = vmatpush1.msra.mxu0 %v1111
      %1163 = vmatprep.subr.mxu0 0.0
      %1164 = vmatpush1.msra.mxu0 %v1112
      %1165 = vmatprep.subr.mxu0 0.0
      %1166 = vmatpush1.msra.mxu0 %v1113
      %1167 = vmatprep.subr.mxu0 0.0
      %1168 = vmatpush1.msra.mxu0 %v1114
      %1169 = vmatprep.subr.mxu0 0.0
      %1170 = vmatpush1.msra.mxu0 %v1115
      %1171 = vmatprep.subr.mxu0 0.0
      %1172 = vmatpush1.msra.mxu0 %v1116
      %1173 = vmatprep.subr.mxu0 0.0
      %1174 = vmatpush1.msra.mxu0 %v1117
      %1175 = vmatprep.subr.mxu0 0.0
      %1176 = vmatpush1.msra.mxu0 %v1118
      %1177 = vmatprep.subr.mxu0 0.0
      %1178 = vmatpush1.msra.mxu0 %v1119
      %1179 = vmatprep.subr.mxu0 0.0
      %1180 = vmatpush1.msra.mxu0 %v1120
      %1181 = vmatprep.subr.mxu0 0.0
      %1182 = vmatpush1.msra.mxu0 %v1121
      %1183 = vmatprep.subr.mxu0 0.0
      %1184 = vmatpush1.msra.mxu0 %v1122
      %1185 = vmatprep.subr.mxu0 0.0
      %1186 = vmatpush1.msra.mxu0 %v1123
      %1187 = vmatprep.subr.mxu0 0.0
      %1188 = vmatpush1.msra.mxu0 %v1124
      %1189 = vmatprep.mubr.f32.mxu0 %v1061
      %1190 = vmatmul.mubr.f32.gmra.mrb[0].mxu0 %v1060
      %v1191 = vpop.f32.mrb[0].mxu0
      %v1192 = vadd.f32 0.0, %v1191
      %v1193 = vpop.f32.mrb[0].mxu0
      %1194 = vmatprep.mubr.f32.mxu0 %v1063
      %1195 = vmatmul.mubr.f32.gmra.mrb[0].mxu0 %v1062
      %v1196 = vpop.f32.mrb[0].mxu0
      %v1197 = vadd.f32 0.0, %v1196
      %v1198 = vpop.f32.mrb[0].mxu0
      %1199 = vmatprep.mubr.f32.mxu0 %v1065
      %1200 = vmatmul.mubr.f32.gmra.mrb[0].mxu0 %v1064
      %v1201 = vpop.f32.mrb[0].mxu0
      %v1202 = vadd.f32 0.0, %v1201
      %v1203 = vpop.f32.mrb[0].mxu0
      %1204 = vmatprep.mubr.f32.mxu0 %v1067
      %1205 = vmatmul.mubr.f32.gmra.mrb[0].mxu0 %v1066
      %v1206 = vpop.f32.mrb[0].mxu0
      %v1207 = vadd.f32 0.0, %v1206
      %v1208 = vpop.f32.mrb[0].mxu0
      %1209 = vmatprep.mubr.f32.mxu0 %v1069
      %1210 = vmatmul.mubr.f32.gmra.mrb[0].mxu0 %v1068
      %v1211 = vpop.f32.mrb[0].mxu0
      %v1212 = vadd.f32 0.0, %v1211
      %v1213 = vpop.f32.mrb[0].mxu0
      %1214 = vmatprep.mubr.f32.mxu0 %v1071
      %1215 = vmatmul.mubr.f32.gmra.mrb[0].mxu0 %v1070
      %v1216 = vpop.f32.mrb[0].mxu0
      %v1217 = vadd.f32 0.0, %v1216
      %v1218 = vpop.f32.mrb[0].mxu0
      %1219 = vmatprep.mubr.f32.mxu0 %v1073
      %1220 = vmatmul.mubr.f32.gmra.mrb[0].mxu0 %v1072
      %v1221 = vpop.f32.mrb[0].mxu0
      %v1222 = vadd.f32 0.0, %v1221
      %v1223 = vpop.f32.mrb[0].mxu0
      %1224 = vmatprep.mubr.f32.mxu0 %v1075
      %1225 = vmatmul.mubr.f32.gmra.mrb[0].mxu0 %v1074
      %v1226 = vpop.f32.mrb[0].mxu0
      %v1227 = vadd.f32 0.0, %v1226
      %v1228 = vpop.f32.mrb[0].mxu0
      %1229 = vmatprep.mubr.f32.mxu0 %v1077
      %1230 = vmatmul.mubr.f32.gmra.mrb[0].mxu0 %v1076
      %v1231 = vpop.f32.mrb[0].mxu0
      %v1232 = vadd.f32 0.0, %v1231
      %v1233 = vpop.f32.mrb[0].mxu0
      %1234 = vmatprep.mubr.f32.mxu0 %v1079
      %1235 = vmatmul.mubr.f32.gmra.mrb[0].mxu0 %v1078
      %v1236 = vpop.f32.mrb[0].mxu0
      %v1237 = vadd.f32 0.0, %v1236
      %v1238 = vpop.f32.mrb[0].mxu0
      %1239 = vmatprep.mubr.f32.mxu0 %v1081
      %1240 = vmatmul.mubr.f32.gmra.mrb[0].mxu0 %v1080
      %v1241 = vpop.f32.mrb[0].mxu0
      %v1242 = vadd.f32 0.0, %v1241
      %v1243 = vpop.f32.mrb[0].mxu0
      %1244 = vmatprep.mubr.f32.mxu0 %v1083
      %1245 = vmatmul.mubr.f32.gmra.mrb[0].mxu0 %v1082
      %v1246 = vpop.f32.mrb[0].mxu0
      %v1247 = vadd.f32 0.0, %v1246
      %v1248 = vpop.f32.mrb[0].mxu0
      %1249 = vmatprep.mubr.f32.mxu0 %v1085
      %1250 = vmatmul.mubr.f32.gmra.mrb[0].mxu0 %v1084
      %v1251 = vpop.f32.mrb[0].mxu0
      %v1252 = vadd.f32 0.0, %v1251
      %v1253 = vpop.f32.mrb[0].mxu0
      %1254 = vmatprep.mubr.f32.mxu0 %v1087
      %1255 = vmatmul.mubr.f32.gmra.mrb[0].mxu0 %v1086
      %v1256 = vpop.f32.mrb[0].mxu0
      %v1257 = vadd.f32 0.0, %v1256
      %v1258 = vpop.f32.mrb[0].mxu0
      %1259 = vmatprep.mubr.f32.mxu0 %v1089
      %1260 = vmatmul.mubr.f32.gmra.mrb[0].mxu0 %v1088
      %v1261 = vpop.f32.mrb[0].mxu0
      %v1262 = vadd.f32 0.0, %v1261
      %v1263 = vpop.f32.mrb[0].mxu0
      %1264 = vmatprep.mubr.f32.mxu0 %v1091
      %1265 = vmatmul.mubr.f32.gmra.mrb[0].mxu0 %v1090
      %v1266 = vpop.f32.mrb[0].mxu0
      %v1267 = vadd.f32 0.0, %v1266
      %v1268 = vpop.f32.mrb[0].mxu0
      %1269 = vdwg.mxu0
      %1270 = vmatprep.subr.mxu0 0.0
      %1271 = vmatpush1.msra.mxu0 %v1092
      %1272 = vmatprep.subr.mxu0 0.0
      %1273 = vmatpush1.msra.mxu0 0.0
      %1274 = vmatprep.subr.mxu0 0.0
      %1275 = vmatpush1.msra.mxu0 0.0
      %1276 = vmatprep.subr.mxu0 0.0
      %1277 = vmatpush1.msra.mxu0 0.0
      %1278 = vmatprep.subr.mxu0 0.0
      %1279 = vmatpush1.msra.mxu0 0.0
      %1280 = vmatprep.subr.mxu0 0.0
      %1281 = vmatpush1.msra.mxu0 0.0
      %1282 = vmatprep.subr.mxu0 0.0
      %1283 = vmatpush1.msra.mxu0 0.0
      %1284 = vmatprep.subr.mxu0 0.0
      %1285 = vmatpush1.msra.mxu0 0.0
      %1286 = vmatprep.subr.mxu0 0.0
      %1287 = vmatpush1.msra.mxu0 0.0
      %1288 = vmatprep.subr.mxu0 0.0
      %1289 = vmatpush1.msra.mxu0 0.0
      %1290 = vmatprep.subr.mxu0 0.0
      %1291 = vmatpush1.msra.mxu0 0.0
      %1292 = vmatprep.subr.mxu0 0.0
      %1293 = vmatpush1.msra.mxu0 0.0
      %1294 = vmatprep.subr.mxu0 0.0
      %1295 = vmatpush1.msra.mxu0 0.0
      %1296 = vmatprep.subr.mxu0 0.0
      %1297 = vmatpush1.msra.mxu0 0.0
      %1298 = vmatprep.subr.mxu0 0.0
      %1299 = vmatpush1.msra.mxu0 0.0
      %1300 = vmatprep.subr.mxu0 0.0
      %1301 = vmatpush1.msra.mxu0 0.0
      %1302 = vmatprep.subr.mxu0 0.0
      %1303 = vmatpush1.msra.mxu0 0.0
      %1304 = vmatprep.subr.mxu0 0.0
      %1305 = vmatpush1.msra.mxu0 0.0
      %1306 = vmatprep.subr.mxu0 0.0
      %1307 = vmatpush1.msra.mxu0 0.0
      %1308 = vmatprep.subr.mxu0 0.0
      %1309 = vmatpush1.msra.mxu0 0.0
      %1310 = vmatprep.subr.mxu0 0.0
      %1311 = vmatpush1.msra.mxu0 0.0
      %1312 = vmatprep.subr.mxu0 0.0
      %1313 = vmatpush1.msra.mxu0 0.0
      %1314 = vmatprep.subr.mxu0 0.0
      %1315 = vmatpush1.msra.mxu0 0.0
      %1316 = vmatprep.subr.mxu0 0.0
      %1317 = vmatpush1.msra.mxu0 0.0
      %1318 = vmatprep.subr.mxu0 0.0
      %1319 = vmatpush1.msra.mxu0 0.0
      %1320 = vmatprep.subr.mxu0 0.0
      %1321 = vmatpush1.msra.mxu0 0.0
      %1322 = vmatprep.subr.mxu0 0.0
      %1323 = vmatpush1.msra.mxu0 0.0
      %1324 = vmatprep.subr.mxu0 0.0
      %1325 = vmatpush1.msra.mxu0 0.0
      %1326 = vmatprep.subr.mxu0 0.0
      %1327 = vmatpush1.msra.mxu0 0.0
      %1328 = vmatprep.subr.mxu0 0.0
      %1329 = vmatpush1.msra.mxu0 0.0
      %1330 = vmatprep.subr.mxu0 0.0
      %1331 = vmatpush1.msra.mxu0 0.0
      %1332 = vmatprep.subr.mxu0 0.0
      %1333 = vmatpush1.msra.mxu0 0.0
      %1334 = vmatprep.mubr.f32.mxu0 0.0
      %1335 = vmatmul.mubr.f32.gmra.mrb[0].mxu0 %v852
      %v1336 = vpop.f32.mrb[0].mxu0
      %v1337 = vadd.f32 %v1192, %v1336
      %v1338 = vpop.f32.mrb[0].mxu0
      %1339 = vmatprep.mubr.f32.mxu0 0.0
      %1340 = vmatmul.mubr.f32.gmra.mrb[0].mxu0 %v855
      %v1341 = vpop.f32.mrb[0].mxu0
      %v1342 = vadd.f32 %v1197, %v1341
      %v1343 = vpop.f32.mrb[0].mxu0
      %1344 = vmatprep.mubr.f32.mxu0 0.0
      %1345 = vmatmul.mubr.f32.gmra.mrb[0].mxu0 %v858
      %v1346 = vpop.f32.mrb[0].mxu0
      %v1347 = vadd.f32 %v1202, %v1346
      %v1348 = vpop.f32.mrb[0].mxu0
      %1349 = vmatprep.mubr.f32.mxu0 0.0
      %1350 = vmatmul.mubr.f32.gmra.mrb[0].mxu0 %v861
      %v1351 = vpop.f32.mrb[0].mxu0
      %v1352 = vadd.f32 %v1207, %v1351
      %v1353 = vpop.f32.mrb[0].mxu0
      %1354 = vmatprep.mubr.f32.mxu0 0.0
      %1355 = vmatmul.mubr.f32.gmra.mrb[0].mxu0 %v864
      %v1356 = vpop.f32.mrb[0].mxu0
      %v1357 = vadd.f32 %v1212, %v1356
      %v1358 = vpop.f32.mrb[0].mxu0
      %1359 = vmatprep.mubr.f32.mxu0 0.0
      %1360 = vmatmul.mubr.f32.gmra.mrb[0].mxu0 %v867
      %v1361 = vpop.f32.mrb[0].mxu0
      %v1362 = vadd.f32 %v1217, %v1361
      %v1363 = vpop.f32.mrb[0].mxu0
      %1364 = vmatprep.mubr.f32.mxu0 0.0
      %1365 = vmatmul.mubr.f32.gmra.mrb[0].mxu0 %v870
      %v1366 = vpop.f32.mrb[0].mxu0
      %v1367 = vadd.f32 %v1222, %v1366
      %v1368 = vpop.f32.mrb[0].mxu0
      %1369 = vmatprep.mubr.f32.mxu0 0.0
      %1370 = vmatmul.mubr.f32.gmra.mrb[0].mxu0 %v873
      %v1371 = vpop.f32.mrb[0].mxu0
      %v1372 = vadd.f32 %v1227, %v1371
      %v1373 = vpop.f32.mrb[0].mxu0
      %1374 = vmatprep.mubr.f32.mxu0 0.0
      %1375 = vmatmul.mubr.f32.gmra.mrb[0].mxu0 %v876
      %v1376 = vpop.f32.mrb[0].mxu0
      %v1377 = vadd.f32 %v1232, %v1376
      %v1378 = vpop.f32.mrb[0].mxu0
      %1379 = vmatprep.mubr.f32.mxu0 0.0
      %1380 = vmatmul.mubr.f32.gmra.mrb[0].mxu0 %v879
      %v1381 = vpop.f32.mrb[0].mxu0
      %v1382 = vadd.f32 %v1237, %v1381
      %v1383 = vpop.f32.mrb[0].mxu0
      %1384 = vmatprep.mubr.f32.mxu0 0.0
      %1385 = vmatmul.mubr.f32.gmra.mrb[0].mxu0 %v882
      %v1386 = vpop.f32.mrb[0].mxu0
      %v1387 = vadd.f32 %v1242, %v1386
      %v1388 = vpop.f32.mrb[0].mxu0
      %1389 = vmatprep.mubr.f32.mxu0 0.0
      %1390 = vmatmul.mubr.f32.gmra.mrb[0].mxu0 %v885
      %v1391 = vpop.f32.mrb[0].mxu0
      %v1392 = vadd.f32 %v1247, %v1391
      %v1393 = vpop.f32.mrb[0].mxu0
      %1394 = vmatprep.mubr.f32.mxu0 0.0
      %1395 = vmatmul.mubr.f32.gmra.mrb[0].mxu0 %v888
      %v1396 = vpop.f32.mrb[0].mxu0
      %v1397 = vadd.f32 %v1252, %v1396
      %v1398 = vpop.f32.mrb[0].mxu0
      %1399 = vmatprep.mubr.f32.mxu0 0.0
      %1400 = vmatmul.mubr.f32.gmra.mrb[0].mxu0 %v891
      %v1401 = vpop.f32.mrb[0].mxu0
      %v1402 = vadd.f32 %v1257, %v1401
      %v1403 = vpop.f32.mrb[0].mxu0
      %1404 = vmatprep.mubr.f32.mxu0 0.0
      %1405 = vmatmul.mubr.f32.gmra.mrb[0].mxu0 %v894
      %v1406 = vpop.f32.mrb[0].mxu0
      %v1407 = vadd.f32 %v1262, %v1406
      %v1408 = vpop.f32.mrb[0].mxu0
      %1409 = vmatprep.mubr.f32.mxu0 0.0
      %1410 = vmatmul.mubr.f32.gmra.mrb[0].mxu0 %v897
      %v1411 = vpop.f32.mrb[0].mxu0
      %v1412 = vadd.f32 %v1267, %v1411
      %v1413 = vpop.f32.mrb[0].mxu0
      %1414 = vdwg.mxu0
      %v1415 = vld [vmem:[%s6] sm:$0x1]
      %v1417 = vlaneseq
      %v1418 = vshrl.u32 %v1417, 7
      %v1419 = vsub.s32 0, %v1418
      %v1420 = vrot.slane %v1415, %v1419
      %v1422 = vadd.f32 %v1337, %v1420
      %v1423 = vadd.f32 %v1342, %v1420
      %v1424 = vadd.f32 %v1347, %v1420
      %v1425 = vadd.f32 %v1352, %v1420
      %v1426 = vadd.f32 %v1357, %v1420
      %v1427 = vadd.f32 %v1362, %v1420
      %v1428 = vadd.f32 %v1367, %v1420
      %v1429 = vadd.f32 %v1372, %v1420
      %v1430 = vadd.f32 %v1377, %v1420
      %v1431 = vadd.f32 %v1382, %v1420
      %v1432 = vadd.f32 %v1387, %v1420
      %v1433 = vadd.f32 %v1392, %v1420
      %v1434 = vadd.f32 %v1397, %v1420
      %v1435 = vadd.f32 %v1402, %v1420
      %v1436 = vadd.f32 %v1407, %v1420
      %v1437 = vadd.f32 %v1412, %v1420
      %1438 = vst.msk [vmem:[%s280] sm:$0xff] %vm310, %v1422
      %1439 = vst.msk [vmem:[%s280 + $0x8] sm:$0xff] %vm310, %v1423
      %1440 = vst.msk [vmem:[%s280 + $0x10] sm:$0xff] %vm310, %v1424
      %1441 = vst.msk [vmem:[%s280 + $0x18] sm:$0xff] %vm310, %v1425
      %1442 = vst.msk [vmem:[%s280 + $0x20] sm:$0xff] %vm310, %v1426
      %1443 = vst.msk [vmem:[%s280 + $0x28] sm:$0xff] %vm310, %v1427
      %1444 = vst.msk [vmem:[%s280 + $0x30] sm:$0xff] %vm310, %v1428
      %1445 = vst.msk [vmem:[%s280 + $0x38] sm:$0xff] %vm310, %v1429
      %1446 = vst.msk [vmem:[%s280 + $0x40] sm:$0xff] %vm310, %v1430
      %1447 = vst.msk [vmem:[%s280 + $0x48] sm:$0xff] %vm310, %v1431
      %1448 = vst.msk [vmem:[%s280 + $0x50] sm:$0xff] %vm310, %v1432
      %1449 = vst.msk [vmem:[%s280 + $0x58] sm:$0xff] %vm310, %v1433
      %1450 = vst.msk [vmem:[%s280 + $0x60] sm:$0xff] %vm310, %v1434
      %1451 = vst.msk [vmem:[%s280 + $0x68] sm:$0xff] %vm310, %v1435
      %1452 = vst.msk [vmem:[%s280 + $0x70] sm:$0xff] %vm310, %v1436
      %1453 = vst.msk [vmem:[%s280 + $0x78] sm:$0xff] %vm310, %v1437
      %s1454 = smul.u32 16, %s18
      %p1455 = scmp.lt.s32.totalorder %s1454, 31
      %s1456 = scalar_select %p1455, %s1454, 31
      %s1457 = smul.addr %s1456, 8
      %s1458 = scalar_lea.vmem %s7, %s1457
      // Predicated region
      $region49: #{tpu_custom_call.1} parent=47 // pred_check
        %p1459 = pneg %p188
      $region50: #{tpu_custom_call.1} parent=47 // pred_check_branch
        %1461 = sbr.rel (%p1459) target = $region52
      $region51: #{tpu_custom_call.1} parent=47 // pred_region
        %s1462 = smul.u32 16, %s18
      $region52: #{tpu_custom_call.1} parent=47 // pred_fallthru
        _
    $region48: #{tpu_custom_call.1} parent=5 // pred_fallthru
      _
    %p1463 = scmp.le.s32.totalorder 2, %s13
    // Predicated region
    $region53: #{tpu_custom_call.1} parent=5 // pred_check
      %p1464 = pneg %p1463
    $region54: #{tpu_custom_call.1} parent=5 // pred_check_branch
      %1466 = sbr.rel (%p1464) target = $region56
    $region55: #{tpu_custom_call.1} parent=5 // pred_region
      %s1467 = ssub.s32 %s13, 2
      // Predicated region
      $region57: #{tpu_custom_call.1} parent=55 // pred_check
        %p1468 = pneg %p194
      $region58: #{tpu_custom_call.1} parent=55 // pred_check_branch
        %1470 = sbr.rel (%p1468) target = $region60
      $region59: #{tpu_custom_call.1} parent=55 // pred_region
        %s1471 = smul.u32 16, %s19
        %p1472 = scmp.lt.s32.totalorder %s1471, 31
        %s1473 = scalar_select %p1472, %s1471, 31
        %s1474 = smul.addr %s1473, 8
        %s1475 = scalar_lea.vmem %s7, %s1474
      $region60: #{tpu_custom_call.1} parent=55 // pred_fallthru
        _
    $region56: #{tpu_custom_call.1} parent=5 // pred_fallthru
      _
  $region6: #{tpu_custom_call.1} parent=0 // loop_footer
    %s17 = sadd.s32 1, %s13
  $region7: #{tpu_custom_call.1} parent=0 // loop_footer_branch
    %12 = sbr.rel target = $region3
  $region8: #{tpu_custom_call.1} parent=0 // loop_exit
    _

</llo_original>
